<compile_context>
chip_gen: v7x
topology: tpu7x:2x2x1
jax: 0.10.0
libtpu: 0.0.40
codegen_flags: <defaults>
</compile_context>

<pallas_src>
import functools

import jax
import jax.numpy as jnp
import numpy as np
from jax.experimental import pallas as pl
from jax.experimental.pallas import tpu as pltpu


# ----------------------------------------------------------------------------
# Fused Pallas kernel: backbone (3x3 s1 + 3x3 s2) -> neck (1x1) -> head (1x1)
# One grid step == one batch element.
# ----------------------------------------------------------------------------
def _fused_detector_kernel(x00, x01, x10, x11,        # (1, H2+1, W2+1, Cin)
                           wk1, bk1, wk2, bk2,        # (9*Cin, C1), (1, C1), ...
                           wk3, bk3, wk4, bk4,
                           o_ref):                     # (1, H2*W2, Cout)
    nb, h2p, w2p, cin = x00.shape          # nb == 1 (one batch element / step)
    h2, w2 = h2p - 1, w2p - 1
    m = nb * h2 * w2
    c1 = bk1.shape[-1]

    xin = (x00, x01, x10, x11)             # input parity planes, index r*2+s

    # ---- backbone conv1: 3x3, stride 1, pad 1, + bias + ReLU ---------------
    # The 9 taps are folded into the matmul K dimension (in-VMEM im2col) and
    # all 4 output parity blocks are stacked along M -> a single matmul.
    parity_lhs = []
    for p in range(2):
        for q in range(2):
            taps = []
            for e in range(3):
                u, r = divmod(p + e, 2)
                for f in range(3):
                    v, s = divmod(q + f, 2)
                    taps.append(xin[r * 2 + s][:, u:u + h2, v:v + w2, :]
                                .reshape(m, cin))
            parity_lhs.append(jnp.concatenate(taps, axis=-1))      # (m, 9*Cin)
    lhs1 = jnp.concatenate(parity_lhs, axis=0)                     # (4m, 9*Cin)
    y1 = jnp.dot(lhs1, wk1[...], preferred_element_type=jnp.float32) + bk1[...]
    y1 = jnp.maximum(y1, 0.0)                                      # (4m, C1)

    # Split back into parity blocks: par[p][q][a, b] = conv1_out[2a+p, 2b+q].
    blk = [y1[k * m:(k + 1) * m].reshape(nb, h2, w2, c1) for k in range(4)]
    par = ((blk[0], blk[1]), (blk[2], blk[3]))

    # ---- backbone conv2: 3x3, stride 2, pad 1, + bias + ReLU ---------------
    # Stride-2 taps are contiguous views of the parity blocks; the pad-1 halo
    # is a zero row / zero column concatenated in only where actually read.
    def shift_down(t):   # rows (i-1), zero entering at the top
        zero = jnp.zeros((nb, 1, w2, c1), t.dtype)
        return jnp.concatenate([zero, t[:, :h2 - 1, :, :]], axis=1)

    def shift_right(t):  # cols (j-1), zero entering at the left
        zero = jnp.zeros((nb, h2, 1, c1), t.dtype)
        return jnp.concatenate([zero, t[:, :, :w2 - 1, :]], axis=2)

    # kernel offset e / f -> (parity index, needs zero-shift)
    row_sel = ((1, True), (0, False), (1, False))
    col_sel = ((1, True), (0, False), (1, False))
    taps2 = []
    for e in range(3):
        pe, need_row_shift = row_sel[e]
        for f in range(3):
            qf, need_col_shift = col_sel[f]
            t = par[pe][qf]
            if need_row_shift:
                t = shift_down(t)
            if need_col_shift:
                t = shift_right(t)
            taps2.append(t.reshape(m, c1))
    lhs2 = jnp.concatenate(taps2, axis=-1)                         # (m, 9*C1)
    y2 = jnp.dot(lhs2, wk2[...], preferred_element_type=jnp.float32) + bk2[...]
    y2 = jnp.maximum(y2, 0.0)                                      # (m, C2)

    # ---- neck: 1x1 conv + ReLU ---------------------------------------------
    y3 = jnp.dot(y2, wk3[...], preferred_element_type=jnp.float32) + bk3[...]
    y3 = jnp.maximum(y3, 0.0)

    # ---- head: 1x1 conv, no activation -------------------------------------
    y4 = jnp.dot(y3, wk4[...], preferred_element_type=jnp.float32) + bk4[...]
    o_ref[...] = y4.reshape(o_ref.shape).astype(o_ref.dtype)


# ----------------------------------------------------------------------------
# jit-ted wrapper: light layout plumbing + single pallas_call
# ----------------------------------------------------------------------------
@functools.partial(jax.jit, static_argnames=("head_out",))
def _detector_forward(params, x_nchw, head_out):
    n, cin, h, w = x_nchw.shape
    assert h % 2 == 0 and w % 2 == 0, "even spatial dims expected"
    h2, w2 = h // 2, w // 2

    # NCHW -> NHWC (real channel count), +1 spatial zero pad, 2x2 parity split
    # so the in-kernel stride-2 conv only needs contiguous slices.
    x = jnp.transpose(x_nchw, (0, 2, 3, 1)).astype(jnp.float32)
    xp = jnp.pad(x, ((0, 0), (1, 1), (1, 1), (0, 0)))
    xr = xp.reshape(n, h2 + 1, 2, w2 + 1, 2, cin)
    planes = tuple(xr[:, :, r, :, s, :] for r in range(2) for s in range(2))

    weight_keys = ("wk1", "bk1", "wk2", "bk2", "wk3", "bk3", "wk4", "bk4")
    ins = planes + tuple(params[k] for k in weight_keys)

    x_spec = pl.BlockSpec((1, h2 + 1, w2 + 1, cin), lambda b: (b, 0, 0, 0))
    w_specs = [pl.BlockSpec(params[k].shape, lambda b: (0, 0))
               for k in weight_keys]
    out_spec = pl.BlockSpec((1, h2 * w2, head_out), lambda b: (b, 0, 0))

    c1 = params["bk1"].shape[-1]
    c2 = params["bk2"].shape[-1]
    c3 = params["bk3"].shape[-1]
    flops = 2 * n * h2 * w2 * (4 * 9 * cin * c1 + 9 * c1 * c2
                               + c2 * c3 + c3 * head_out)
    bytes_accessed = (sum(int(np.prod(a.shape)) * 4 for a in ins)
                      + n * h2 * w2 * head_out * 4)

    out = pl.pallas_call(
        _fused_detector_kernel,
        grid=(n,),
        out_shape=jax.ShapeDtypeStruct((n, h2 * w2, head_out), jnp.float32),
        in_specs=[x_spec] * 4 + w_specs,
        out_specs=out_spec,
        compiler_params=pltpu.CompilerParams(
            dimension_semantics=("parallel",)),
        cost_estimate=pl.CostEstimate(flops=flops, transcendentals=0,
                                      bytes_accessed=bytes_accessed),
    )(*ins)

    out = out.reshape(n, h2, w2, head_out)
    return jnp.transpose(out, (0, 3, 1, 2))   # NHWC -> NCHW


# ----------------------------------------------------------------------------
# BaseDetector: backbone -> neck -> head with deterministic weights
# ----------------------------------------------------------------------------
class BaseDetectorPallas:
    def __init__(self, in_ch=4, num_anchors=3, num_classes=2, key=None):
        if key is None:
            key = jax.random.PRNGKey(0)
        ks = jax.random.split(key, 8)
        self.head_out = num_anchors * (5 + num_classes)

        def winit(k, shape):
            fan_in = shape[0] * shape[1] * shape[2]
            return (jax.random.normal(k, shape, jnp.float32)
                    / np.sqrt(fan_in)).astype(jnp.float32)

        def binit(k, nch):
            return 0.1 * jax.random.normal(k, (nch,), jnp.float32)

        # Raw HWIO weights (also used by the lax.conv reference).
        self.bb_w1 = winit(ks[0], (3, 3, in_ch, 8))
        self.bb_b1 = binit(ks[4], 8)
        self.bb_w2 = winit(ks[1], (3, 3, 8, 16))
        self.bb_b2 = binit(ks[5], 16)
        self.nk_w = winit(ks[2], (1, 1, 16, 16))
        self.nk_b = binit(ks[6], 16)
        self.hd_w = winit(ks[3], (1, 1, 16, self.head_out))
        self.hd_b = binit(ks[7], self.head_out)

        def fold(wt):   # (kh, kw, cin, cout) -> (kh*kw*cin, cout), tap-major K
            kh, kw, ci, co = wt.shape
            return wt.reshape(kh * kw * ci, co)

        def row(b):     # (C,) -> (1, C)
            return b.reshape(1, -1)

        # Real-size (unpadded) kernel parameters: ~8 KiB of weight DMA total.
        self.params = {
            "wk1": fold(self.bb_w1), "bk1": row(self.bb_b1),
            "wk2": fold(self.bb_w2), "bk2": row(self.bb_b2),
            "wk3": fold(self.nk_w),  "bk3": row(self.nk_b),
            "wk4": fold(self.hd_w),  "bk4": row(self.hd_b),
        }

    def forward(self, x_nchw):
        return _detector_forward(self.params, x_nchw, head_out=self.head_out)


# ----------------------------------------------------------------------------
# Pure-JAX reference (lax.conv) for the correctness check
# ----------------------------------------------------------------------------
def _conv_ref(x_nhwc, w_hwio, b, stride, padding, relu):
    y = jax.lax.conv_general_dilated(
        x_nhwc, w_hwio, window_strides=(stride, stride),
        padding=[(padding, padding), (padding, padding)],
        dimension_numbers=("NHWC", "HWIO", "NHWC"),
        precision=jax.lax.Precision.HIGHEST)
    y = y + b.reshape(1, 1, 1, -1)
    return jnp.maximum(y, 0.0) if relu else y


def _forward_ref(model, x_nchw):
    x = jnp.transpose(x_nchw, (0, 2, 3, 1)).astype(jnp.float32)
    x = _conv_ref(x, model.bb_w1, model.bb_b1, 1, 1, True)
    x = _conv_ref(x, model.bb_w2, model.bb_b2, 2, 1, True)
    x = _conv_ref(x, model.nk_w, model.nk_b, 1, 0, True)
    x = _conv_ref(x, model.hd_w, model.hd_b, 1, 0, False)
    return jnp.transpose(x, (0, 3, 1, 2))


if __name__ == "__main__":
    key = jax.random.PRNGKey(0)
    k_in, k_par = jax.random.split(key)

    # Small NCHW input consistent with a detector: batch=2, ch=4, 16x16 image.
    x = jax.random.normal(k_in, (2, 4, 16, 16), jnp.float32)
    model = BaseDetectorPallas(in_ch=4, num_anchors=3, num_classes=2, key=k_par)

    out = jax.block_until_ready(model.forward(x))
    ref = jax.block_until_ready(_forward_ref(model, x))

    assert out.shape == (2, 21, 8, 8), out.shape
    np.testing.assert_allclose(np.asarray(out), np.asarray(ref),
                               rtol=5e-4, atol=5e-4)
    print("KERNEL_OK")
</pallas_src>

<mosaic_0001>
module attributes {stable_mosaic.version = 11 : i64} {
  func.func @_fused_detector_kernel(%arg0: i32, %arg1: memref<1x9x9x4xf32, #tpu.memory_space<vmem>>, %arg2: memref<1x9x9x4xf32, #tpu.memory_space<vmem>>, %arg3: memref<1x9x9x4xf32, #tpu.memory_space<vmem>>, %arg4: memref<1x9x9x4xf32, #tpu.memory_space<vmem>>, %arg5: memref<36x8xf32, #tpu.memory_space<vmem>>, %arg6: memref<1x8xf32, #tpu.memory_space<vmem>>, %arg7: memref<72x16xf32, #tpu.memory_space<vmem>>, %arg8: memref<1x16xf32, #tpu.memory_space<vmem>>, %arg9: memref<16x16xf32, #tpu.memory_space<vmem>>, %arg10: memref<1x16xf32, #tpu.memory_space<vmem>>, %arg11: memref<16x21xf32, #tpu.memory_space<vmem>>, %arg12: memref<1x21xf32, #tpu.memory_space<vmem>>, %arg13: memref<1x64x21xf32, #tpu.memory_space<vmem>>) attributes {dimension_semantics = [#tpu.dimension_semantics<parallel>], iteration_bounds = array<i64: 2>, scalar_prefetch = 0 : i64, scratch_operands = 0 : i64, tpu.core_type = #tpu.core_type<tc>, window_params = [{transform_indices = @transform_0, window_bounds = array<i64: 1, 9, 9, 4>}, {transform_indices = @transform_1, window_bounds = array<i64: 1, 9, 9, 4>}, {transform_indices = @transform_2, window_bounds = array<i64: 1, 9, 9, 4>}, {transform_indices = @transform_3, window_bounds = array<i64: 1, 9, 9, 4>}, {pipeline_mode = #tpu.pipeline_mode<synchronous>, transform_indices = @transform_4, window_bounds = array<i64: 36, 8>}, {pipeline_mode = #tpu.pipeline_mode<synchronous>, transform_indices = @transform_5, window_bounds = array<i64: 1, 8>}, {pipeline_mode = #tpu.pipeline_mode<synchronous>, transform_indices = @transform_6, window_bounds = array<i64: 72, 16>}, {pipeline_mode = #tpu.pipeline_mode<synchronous>, transform_indices = @transform_7, window_bounds = array<i64: 1, 16>}, {pipeline_mode = #tpu.pipeline_mode<synchronous>, transform_indices = @transform_8, window_bounds = array<i64: 16, 16>}, {pipeline_mode = #tpu.pipeline_mode<synchronous>, transform_indices = @transform_9, window_bounds = array<i64: 1, 16>}, {pipeline_mode = #tpu.pipeline_mode<synchronous>, transform_indices = @transform_10, window_bounds = array<i64: 16, 21>}, {pipeline_mode = #tpu.pipeline_mode<synchronous>, transform_indices = @transform_11, window_bounds = array<i64: 1, 21>}, {transform_indices = @transform_12, window_bounds = array<i64: 1, 64, 21>}]} {
    %c0 = arith.constant 0 : index
    %c0_0 = arith.constant 0 : index
    %c0_1 = arith.constant 0 : index
    %c0_2 = arith.constant 0 : index
    %0 = vector.load %arg1[%c0, %c0_0, %c0_1, %c0_2] : memref<1x9x9x4xf32, #tpu.memory_space<vmem>>, vector<1x8x8x4xf32>
    %1 = vector.shape_cast %0 : vector<1x8x8x4xf32> to vector<64x4xf32>
    %c0_3 = arith.constant 0 : index
    %c0_4 = arith.constant 0 : index
    %c0_5 = arith.constant 0 : index
    %c0_6 = arith.constant 0 : index
    %2 = vector.load %arg2[%c0_3, %c0_4, %c0_5, %c0_6] : memref<1x9x9x4xf32, #tpu.memory_space<vmem>>, vector<1x8x8x4xf32>
    %3 = vector.shape_cast %2 : vector<1x8x8x4xf32> to vector<64x4xf32>
    %c0_7 = arith.constant 0 : index
    %c0_8 = arith.constant 0 : index
    %c1 = arith.constant 1 : index
    %c0_9 = arith.constant 0 : index
    %4 = vector.load %arg1[%c0_7, %c0_8, %c1, %c0_9] : memref<1x9x9x4xf32, #tpu.memory_space<vmem>>, vector<1x8x8x4xf32>
    %5 = vector.shape_cast %4 : vector<1x8x8x4xf32> to vector<64x4xf32>
    %c0_10 = arith.constant 0 : index
    %c0_11 = arith.constant 0 : index
    %c0_12 = arith.constant 0 : index
    %c0_13 = arith.constant 0 : index
    %6 = vector.load %arg3[%c0_10, %c0_11, %c0_12, %c0_13] : memref<1x9x9x4xf32, #tpu.memory_space<vmem>>, vector<1x8x8x4xf32>
    %7 = vector.shape_cast %6 : vector<1x8x8x4xf32> to vector<64x4xf32>
    %c0_14 = arith.constant 0 : index
    %c0_15 = arith.constant 0 : index
    %c0_16 = arith.constant 0 : index
    %c0_17 = arith.constant 0 : index
    %8 = vector.load %arg4[%c0_14, %c0_15, %c0_16, %c0_17] : memref<1x9x9x4xf32, #tpu.memory_space<vmem>>, vector<1x8x8x4xf32>
    %9 = vector.shape_cast %8 : vector<1x8x8x4xf32> to vector<64x4xf32>
    %c0_18 = arith.constant 0 : index
    %c0_19 = arith.constant 0 : index
    %c1_20 = arith.constant 1 : index
    %c0_21 = arith.constant 0 : index
    %10 = vector.load %arg3[%c0_18, %c0_19, %c1_20, %c0_21] : memref<1x9x9x4xf32, #tpu.memory_space<vmem>>, vector<1x8x8x4xf32>
    %11 = vector.shape_cast %10 : vector<1x8x8x4xf32> to vector<64x4xf32>
    %c0_22 = arith.constant 0 : index
    %c1_23 = arith.constant 1 : index
    %c0_24 = arith.constant 0 : index
    %c0_25 = arith.constant 0 : index
    %12 = vector.load %arg1[%c0_22, %c1_23, %c0_24, %c0_25] : memref<1x9x9x4xf32, #tpu.memory_space<vmem>>, vector<1x8x8x4xf32>
    %13 = vector.shape_cast %12 : vector<1x8x8x4xf32> to vector<64x4xf32>
    %c0_26 = arith.constant 0 : index
    %c1_27 = arith.constant 1 : index
    %c0_28 = arith.constant 0 : index
    %c0_29 = arith.constant 0 : index
    %14 = vector.load %arg2[%c0_26, %c1_27, %c0_28, %c0_29] : memref<1x9x9x4xf32, #tpu.memory_space<vmem>>, vector<1x8x8x4xf32>
    %15 = vector.shape_cast %14 : vector<1x8x8x4xf32> to vector<64x4xf32>
    %c0_30 = arith.constant 0 : index
    %c1_31 = arith.constant 1 : index
    %c1_32 = arith.constant 1 : index
    %c0_33 = arith.constant 0 : index
    %16 = vector.load %arg1[%c0_30, %c1_31, %c1_32, %c0_33] : memref<1x9x9x4xf32, #tpu.memory_space<vmem>>, vector<1x8x8x4xf32>
    %17 = vector.shape_cast %16 : vector<1x8x8x4xf32> to vector<64x4xf32>
    %18 = tpu.concatenate %1, %3, %5, %7, %9, %11, %13, %15, %17 in 1 : vector<64x4xf32>, vector<64x4xf32>, vector<64x4xf32>, vector<64x4xf32>, vector<64x4xf32>, vector<64x4xf32>, vector<64x4xf32>, vector<64x4xf32>, vector<64x4xf32> -> vector<64x36xf32>
    %c0_34 = arith.constant 0 : index
    %c0_35 = arith.constant 0 : index
    %c0_36 = arith.constant 0 : index
    %c0_37 = arith.constant 0 : index
    %19 = vector.load %arg2[%c0_34, %c0_35, %c0_36, %c0_37] : memref<1x9x9x4xf32, #tpu.memory_space<vmem>>, vector<1x8x8x4xf32>
    %20 = vector.shape_cast %19 : vector<1x8x8x4xf32> to vector<64x4xf32>
    %c0_38 = arith.constant 0 : index
    %c0_39 = arith.constant 0 : index
    %c1_40 = arith.constant 1 : index
    %c0_41 = arith.constant 0 : index
    %21 = vector.load %arg1[%c0_38, %c0_39, %c1_40, %c0_41] : memref<1x9x9x4xf32, #tpu.memory_space<vmem>>, vector<1x8x8x4xf32>
    %22 = vector.shape_cast %21 : vector<1x8x8x4xf32> to vector<64x4xf32>
    %c0_42 = arith.constant 0 : index
    %c0_43 = arith.constant 0 : index
    %c1_44 = arith.constant 1 : index
    %c0_45 = arith.constant 0 : index
    %23 = vector.load %arg2[%c0_42, %c0_43, %c1_44, %c0_45] : memref<1x9x9x4xf32, #tpu.memory_space<vmem>>, vector<1x8x8x4xf32>
    %24 = vector.shape_cast %23 : vector<1x8x8x4xf32> to vector<64x4xf32>
    %c0_46 = arith.constant 0 : index
    %c0_47 = arith.constant 0 : index
    %c0_48 = arith.constant 0 : index
    %c0_49 = arith.constant 0 : index
    %25 = vector.load %arg4[%c0_46, %c0_47, %c0_48, %c0_49] : memref<1x9x9x4xf32, #tpu.memory_space<vmem>>, vector<1x8x8x4xf32>
    %26 = vector.shape_cast %25 : vector<1x8x8x4xf32> to vector<64x4xf32>
    %c0_50 = arith.constant 0 : index
    %c0_51 = arith.constant 0 : index
    %c1_52 = arith.constant 1 : index
    %c0_53 = arith.constant 0 : index
    %27 = vector.load %arg3[%c0_50, %c0_51, %c1_52, %c0_53] : memref<1x9x9x4xf32, #tpu.memory_space<vmem>>, vector<1x8x8x4xf32>
    %28 = vector.shape_cast %27 : vector<1x8x8x4xf32> to vector<64x4xf32>
    %c0_54 = arith.constant 0 : index
    %c0_55 = arith.constant 0 : index
    %c1_56 = arith.constant 1 : index
    %c0_57 = arith.constant 0 : index
    %29 = vector.load %arg4[%c0_54, %c0_55, %c1_56, %c0_57] : memref<1x9x9x4xf32, #tpu.memory_space<vmem>>, vector<1x8x8x4xf32>
    %30 = vector.shape_cast %29 : vector<1x8x8x4xf32> to vector<64x4xf32>
    %c0_58 = arith.constant 0 : index
    %c1_59 = arith.constant 1 : index
    %c0_60 = arith.constant 0 : index
    %c0_61 = arith.constant 0 : index
    %31 = vector.load %arg2[%c0_58, %c1_59, %c0_60, %c0_61] : memref<1x9x9x4xf32, #tpu.memory_space<vmem>>, vector<1x8x8x4xf32>
    %32 = vector.shape_cast %31 : vector<1x8x8x4xf32> to vector<64x4xf32>
    %c0_62 = arith.constant 0 : index
    %c1_63 = arith.constant 1 : index
    %c1_64 = arith.constant 1 : index
    %c0_65 = arith.constant 0 : index
    %33 = vector.load %arg1[%c0_62, %c1_63, %c1_64, %c0_65] : memref<1x9x9x4xf32, #tpu.memory_space<vmem>>, vector<1x8x8x4xf32>
    %34 = vector.shape_cast %33 : vector<1x8x8x4xf32> to vector<64x4xf32>
    %c0_66 = arith.constant 0 : index
    %c1_67 = arith.constant 1 : index
    %c1_68 = arith.constant 1 : index
    %c0_69 = arith.constant 0 : index
    %35 = vector.load %arg2[%c0_66, %c1_67, %c1_68, %c0_69] : memref<1x9x9x4xf32, #tpu.memory_space<vmem>>, vector<1x8x8x4xf32>
    %36 = vector.shape_cast %35 : vector<1x8x8x4xf32> to vector<64x4xf32>
    %37 = tpu.concatenate %20, %22, %24, %26, %28, %30, %32, %34, %36 in 1 : vector<64x4xf32>, vector<64x4xf32>, vector<64x4xf32>, vector<64x4xf32>, vector<64x4xf32>, vector<64x4xf32>, vector<64x4xf32>, vector<64x4xf32>, vector<64x4xf32> -> vector<64x36xf32>
    %c0_70 = arith.constant 0 : index
    %c0_71 = arith.constant 0 : index
    %c0_72 = arith.constant 0 : index
    %c0_73 = arith.constant 0 : index
    %38 = vector.load %arg3[%c0_70, %c0_71, %c0_72, %c0_73] : memref<1x9x9x4xf32, #tpu.memory_space<vmem>>, vector<1x8x8x4xf32>
    %39 = vector.shape_cast %38 : vector<1x8x8x4xf32> to vector<64x4xf32>
    %c0_74 = arith.constant 0 : index
    %c0_75 = arith.constant 0 : index
    %c0_76 = arith.constant 0 : index
    %c0_77 = arith.constant 0 : index
    %40 = vector.load %arg4[%c0_74, %c0_75, %c0_76, %c0_77] : memref<1x9x9x4xf32, #tpu.memory_space<vmem>>, vector<1x8x8x4xf32>
    %41 = vector.shape_cast %40 : vector<1x8x8x4xf32> to vector<64x4xf32>
    %c0_78 = arith.constant 0 : index
    %c0_79 = arith.constant 0 : index
    %c1_80 = arith.constant 1 : index
    %c0_81 = arith.constant 0 : index
    %42 = vector.load %arg3[%c0_78, %c0_79, %c1_80, %c0_81] : memref<1x9x9x4xf32, #tpu.memory_space<vmem>>, vector<1x8x8x4xf32>
    %43 = vector.shape_cast %42 : vector<1x8x8x4xf32> to vector<64x4xf32>
    %c0_82 = arith.constant 0 : index
    %c1_83 = arith.constant 1 : index
    %c0_84 = arith.constant 0 : index
    %c0_85 = arith.constant 0 : index
    %44 = vector.load %arg1[%c0_82, %c1_83, %c0_84, %c0_85] : memref<1x9x9x4xf32, #tpu.memory_space<vmem>>, vector<1x8x8x4xf32>
    %45 = vector.shape_cast %44 : vector<1x8x8x4xf32> to vector<64x4xf32>
    %c0_86 = arith.constant 0 : index
    %c1_87 = arith.constant 1 : index
    %c0_88 = arith.constant 0 : index
    %c0_89 = arith.constant 0 : index
    %46 = vector.load %arg2[%c0_86, %c1_87, %c0_88, %c0_89] : memref<1x9x9x4xf32, #tpu.memory_space<vmem>>, vector<1x8x8x4xf32>
    %47 = vector.shape_cast %46 : vector<1x8x8x4xf32> to vector<64x4xf32>
    %c0_90 = arith.constant 0 : index
    %c1_91 = arith.constant 1 : index
    %c1_92 = arith.constant 1 : index
    %c0_93 = arith.constant 0 : index
    %48 = vector.load %arg1[%c0_90, %c1_91, %c1_92, %c0_93] : memref<1x9x9x4xf32, #tpu.memory_space<vmem>>, vector<1x8x8x4xf32>
    %49 = vector.shape_cast %48 : vector<1x8x8x4xf32> to vector<64x4xf32>
    %c0_94 = arith.constant 0 : index
    %c1_95 = arith.constant 1 : index
    %c0_96 = arith.constant 0 : index
    %c0_97 = arith.constant 0 : index
    %50 = vector.load %arg3[%c0_94, %c1_95, %c0_96, %c0_97] : memref<1x9x9x4xf32, #tpu.memory_space<vmem>>, vector<1x8x8x4xf32>
    %51 = vector.shape_cast %50 : vector<1x8x8x4xf32> to vector<64x4xf32>
    %c0_98 = arith.constant 0 : index
    %c1_99 = arith.constant 1 : index
    %c0_100 = arith.constant 0 : index
    %c0_101 = arith.constant 0 : index
    %52 = vector.load %arg4[%c0_98, %c1_99, %c0_100, %c0_101] : memref<1x9x9x4xf32, #tpu.memory_space<vmem>>, vector<1x8x8x4xf32>
    %53 = vector.shape_cast %52 : vector<1x8x8x4xf32> to vector<64x4xf32>
    %c0_102 = arith.constant 0 : index
    %c1_103 = arith.constant 1 : index
    %c1_104 = arith.constant 1 : index
    %c0_105 = arith.constant 0 : index
    %54 = vector.load %arg3[%c0_102, %c1_103, %c1_104, %c0_105] : memref<1x9x9x4xf32, #tpu.memory_space<vmem>>, vector<1x8x8x4xf32>
    %55 = vector.shape_cast %54 : vector<1x8x8x4xf32> to vector<64x4xf32>
    %56 = tpu.concatenate %39, %41, %43, %45, %47, %49, %51, %53, %55 in 1 : vector<64x4xf32>, vector<64x4xf32>, vector<64x4xf32>, vector<64x4xf32>, vector<64x4xf32>, vector<64x4xf32>, vector<64x4xf32>, vector<64x4xf32>, vector<64x4xf32> -> vector<64x36xf32>
    %c0_106 = arith.constant 0 : index
    %c0_107 = arith.constant 0 : index
    %c0_108 = arith.constant 0 : index
    %c0_109 = arith.constant 0 : index
    %57 = vector.load %arg4[%c0_106, %c0_107, %c0_108, %c0_109] : memref<1x9x9x4xf32, #tpu.memory_space<vmem>>, vector<1x8x8x4xf32>
    %58 = vector.shape_cast %57 : vector<1x8x8x4xf32> to vector<64x4xf32>
    %c0_110 = arith.constant 0 : index
    %c0_111 = arith.constant 0 : index
    %c1_112 = arith.constant 1 : index
    %c0_113 = arith.constant 0 : index
    %59 = vector.load %arg3[%c0_110, %c0_111, %c1_112, %c0_113] : memref<1x9x9x4xf32, #tpu.memory_space<vmem>>, vector<1x8x8x4xf32>
    %60 = vector.shape_cast %59 : vector<1x8x8x4xf32> to vector<64x4xf32>
    %c0_114 = arith.constant 0 : index
    %c0_115 = arith.constant 0 : index
    %c1_116 = arith.constant 1 : index
    %c0_117 = arith.constant 0 : index
    %61 = vector.load %arg4[%c0_114, %c0_115, %c1_116, %c0_117] : memref<1x9x9x4xf32, #tpu.memory_space<vmem>>, vector<1x8x8x4xf32>
    %62 = vector.shape_cast %61 : vector<1x8x8x4xf32> to vector<64x4xf32>
    %c0_118 = arith.constant 0 : index
    %c1_119 = arith.constant 1 : index
    %c0_120 = arith.constant 0 : index
    %c0_121 = arith.constant 0 : index
    %63 = vector.load %arg2[%c0_118, %c1_119, %c0_120, %c0_121] : memref<1x9x9x4xf32, #tpu.memory_space<vmem>>, vector<1x8x8x4xf32>
    %64 = vector.shape_cast %63 : vector<1x8x8x4xf32> to vector<64x4xf32>
    %c0_122 = arith.constant 0 : index
    %c1_123 = arith.constant 1 : index
    %c1_124 = arith.constant 1 : index
    %c0_125 = arith.constant 0 : index
    %65 = vector.load %arg1[%c0_122, %c1_123, %c1_124, %c0_125] : memref<1x9x9x4xf32, #tpu.memory_space<vmem>>, vector<1x8x8x4xf32>
    %66 = vector.shape_cast %65 : vector<1x8x8x4xf32> to vector<64x4xf32>
    %c0_126 = arith.constant 0 : index
    %c1_127 = arith.constant 1 : index
    %c1_128 = arith.constant 1 : index
    %c0_129 = arith.constant 0 : index
    %67 = vector.load %arg2[%c0_126, %c1_127, %c1_128, %c0_129] : memref<1x9x9x4xf32, #tpu.memory_space<vmem>>, vector<1x8x8x4xf32>
    %68 = vector.shape_cast %67 : vector<1x8x8x4xf32> to vector<64x4xf32>
    %c0_130 = arith.constant 0 : index
    %c1_131 = arith.constant 1 : index
    %c0_132 = arith.constant 0 : index
    %c0_133 = arith.constant 0 : index
    %69 = vector.load %arg4[%c0_130, %c1_131, %c0_132, %c0_133] : memref<1x9x9x4xf32, #tpu.memory_space<vmem>>, vector<1x8x8x4xf32>
    %70 = vector.shape_cast %69 : vector<1x8x8x4xf32> to vector<64x4xf32>
    %c0_134 = arith.constant 0 : index
    %c1_135 = arith.constant 1 : index
    %c1_136 = arith.constant 1 : index
    %c0_137 = arith.constant 0 : index
    %71 = vector.load %arg3[%c0_134, %c1_135, %c1_136, %c0_137] : memref<1x9x9x4xf32, #tpu.memory_space<vmem>>, vector<1x8x8x4xf32>
    %72 = vector.shape_cast %71 : vector<1x8x8x4xf32> to vector<64x4xf32>
    %c0_138 = arith.constant 0 : index
    %c1_139 = arith.constant 1 : index
    %c1_140 = arith.constant 1 : index
    %c0_141 = arith.constant 0 : index
    %73 = vector.load %arg4[%c0_138, %c1_139, %c1_140, %c0_141] : memref<1x9x9x4xf32, #tpu.memory_space<vmem>>, vector<1x8x8x4xf32>
    %74 = vector.shape_cast %73 : vector<1x8x8x4xf32> to vector<64x4xf32>
    %75 = tpu.concatenate %58, %60, %62, %64, %66, %68, %70, %72, %74 in 1 : vector<64x4xf32>, vector<64x4xf32>, vector<64x4xf32>, vector<64x4xf32>, vector<64x4xf32>, vector<64x4xf32>, vector<64x4xf32>, vector<64x4xf32>, vector<64x4xf32> -> vector<64x36xf32>
    %76 = tpu.concatenate %18, %37, %56, %75 in 0 : vector<64x36xf32>, vector<64x36xf32>, vector<64x36xf32>, vector<64x36xf32> -> vector<256x36xf32>
    %c0_142 = arith.constant 0 : index
    %c0_143 = arith.constant 0 : index
    %77 = vector.load %arg5[%c0_142, %c0_143] : memref<36x8xf32, #tpu.memory_space<vmem>>, vector<36x8xf32>
    %cst = arith.constant dense<0.000000e+00> : vector<256x8xf32>
    %78 = tpu.matmul %76, %77, %cst {dimension_numbers = #tpu.dot_dimension_numbers<[1], [0], [0], [1], [0, 0, 1, 1], [], []>} : vector<256x36xf32>, vector<36x8xf32>, vector<256x8xf32> -> vector<256x8xf32>
    %c0_144 = arith.constant 0 : index
    %c0_145 = arith.constant 0 : index
    %79 = vector.load %arg6[%c0_144, %c0_145] : memref<1x8xf32, #tpu.memory_space<vmem>>, vector<1x8xf32>
    %80 = vector.broadcast %79 : vector<1x8xf32> to vector<256x8xf32>
    %81 = arith.addf %78, %80 : vector<256x8xf32>
    %cst_146 = arith.constant 0.000000e+00 : f32
    %82 = vector.broadcast %cst_146 : f32 to vector<256x8xf32>
    %83 = arith.maximumf %81, %82 : vector<256x8xf32>
    %84 = vector.extract_strided_slice %83 {offsets = [0, 0], sizes = [64, 8], strides = [1, 1]} : vector<256x8xf32> to vector<64x8xf32>
    %85 = vector.shape_cast %84 : vector<64x8xf32> to vector<1x8x8x8xf32>
    %86 = vector.extract_strided_slice %83 {offsets = [64, 0], sizes = [64, 8], strides = [1, 1]} : vector<256x8xf32> to vector<64x8xf32>
    %87 = vector.shape_cast %86 : vector<64x8xf32> to vector<1x8x8x8xf32>
    %88 = vector.extract_strided_slice %83 {offsets = [128, 0], sizes = [64, 8], strides = [1, 1]} : vector<256x8xf32> to vector<64x8xf32>
    %89 = vector.shape_cast %88 : vector<64x8xf32> to vector<1x8x8x8xf32>
    %90 = vector.extract_strided_slice %83 {offsets = [192, 0], sizes = [64, 8], strides = [1, 1]} : vector<256x8xf32> to vector<64x8xf32>
    %91 = vector.shape_cast %90 : vector<64x8xf32> to vector<1x8x8x8xf32>
    %cst_147 = arith.constant 0.000000e+00 : f32
    %92 = vector.broadcast %cst_147 : f32 to vector<1x1x8x8xf32>
    %93 = vector.extract_strided_slice %91 {offsets = [0, 0, 0, 0], sizes = [1, 7, 8, 8], strides = [1, 1, 1, 1]} : vector<1x8x8x8xf32> to vector<1x7x8x8xf32>
    %94 = tpu.concatenate %92, %93 in 1 : vector<1x1x8x8xf32>, vector<1x7x8x8xf32> -> vector<1x8x8x8xf32>
    %cst_148 = arith.constant 0.000000e+00 : f32
    %95 = vector.broadcast %cst_148 : f32 to vector<1x8x1x8xf32>
    %96 = vector.extract_strided_slice %94 {offsets = [0, 0, 0, 0], sizes = [1, 8, 7, 8], strides = [1, 1, 1, 1]} : vector<1x8x8x8xf32> to vector<1x8x7x8xf32>
    %97 = tpu.concatenate %95, %96 in 2 : vector<1x8x1x8xf32>, vector<1x8x7x8xf32> -> vector<1x8x8x8xf32>
    %98 = vector.shape_cast %97 : vector<1x8x8x8xf32> to vector<64x8xf32>
    %cst_149 = arith.constant 0.000000e+00 : f32
    %99 = vector.broadcast %cst_149 : f32 to vector<1x1x8x8xf32>
    %100 = vector.extract_strided_slice %89 {offsets = [0, 0, 0, 0], sizes = [1, 7, 8, 8], strides = [1, 1, 1, 1]} : vector<1x8x8x8xf32> to vector<1x7x8x8xf32>
    %101 = tpu.concatenate %99, %100 in 1 : vector<1x1x8x8xf32>, vector<1x7x8x8xf32> -> vector<1x8x8x8xf32>
    %102 = vector.shape_cast %101 : vector<1x8x8x8xf32> to vector<64x8xf32>
    %cst_150 = arith.constant 0.000000e+00 : f32
    %103 = vector.broadcast %cst_150 : f32 to vector<1x1x8x8xf32>
    %104 = vector.extract_strided_slice %91 {offsets = [0, 0, 0, 0], sizes = [1, 7, 8, 8], strides = [1, 1, 1, 1]} : vector<1x8x8x8xf32> to vector<1x7x8x8xf32>
    %105 = tpu.concatenate %103, %104 in 1 : vector<1x1x8x8xf32>, vector<1x7x8x8xf32> -> vector<1x8x8x8xf32>
    %106 = vector.shape_cast %105 : vector<1x8x8x8xf32> to vector<64x8xf32>
    %cst_151 = arith.constant 0.000000e+00 : f32
    %107 = vector.broadcast %cst_151 : f32 to vector<1x8x1x8xf32>
    %108 = vector.extract_strided_slice %87 {offsets = [0, 0, 0, 0], sizes = [1, 8, 7, 8], strides = [1, 1, 1, 1]} : vector<1x8x8x8xf32> to vector<1x8x7x8xf32>
    %109 = tpu.concatenate %107, %108 in 2 : vector<1x8x1x8xf32>, vector<1x8x7x8xf32> -> vector<1x8x8x8xf32>
    %110 = vector.shape_cast %109 : vector<1x8x8x8xf32> to vector<64x8xf32>
    %111 = vector.shape_cast %85 : vector<1x8x8x8xf32> to vector<64x8xf32>
    %112 = vector.shape_cast %87 : vector<1x8x8x8xf32> to vector<64x8xf32>
    %cst_152 = arith.constant 0.000000e+00 : f32
    %113 = vector.broadcast %cst_152 : f32 to vector<1x8x1x8xf32>
    %114 = vector.extract_strided_slice %91 {offsets = [0, 0, 0, 0], sizes = [1, 8, 7, 8], strides = [1, 1, 1, 1]} : vector<1x8x8x8xf32> to vector<1x8x7x8xf32>
    %115 = tpu.concatenate %113, %114 in 2 : vector<1x8x1x8xf32>, vector<1x8x7x8xf32> -> vector<1x8x8x8xf32>
    %116 = vector.shape_cast %115 : vector<1x8x8x8xf32> to vector<64x8xf32>
    %117 = vector.shape_cast %89 : vector<1x8x8x8xf32> to vector<64x8xf32>
    %118 = vector.shape_cast %91 : vector<1x8x8x8xf32> to vector<64x8xf32>
    %119 = tpu.concatenate %98, %102, %106, %110, %111, %112, %116, %117, %118 in 1 : vector<64x8xf32>, vector<64x8xf32>, vector<64x8xf32>, vector<64x8xf32>, vector<64x8xf32>, vector<64x8xf32>, vector<64x8xf32>, vector<64x8xf32>, vector<64x8xf32> -> vector<64x72xf32>
    %c0_153 = arith.constant 0 : index
    %c0_154 = arith.constant 0 : index
    %120 = vector.load %arg7[%c0_153, %c0_154] : memref<72x16xf32, #tpu.memory_space<vmem>>, vector<72x16xf32>
    %cst_155 = arith.constant dense<0.000000e+00> : vector<64x16xf32>
    %121 = tpu.matmul %119, %120, %cst_155 {dimension_numbers = #tpu.dot_dimension_numbers<[1], [0], [0], [1], [0, 0, 1, 1], [], []>} : vector<64x72xf32>, vector<72x16xf32>, vector<64x16xf32> -> vector<64x16xf32>
    %c0_156 = arith.constant 0 : index
    %c0_157 = arith.constant 0 : index
    %122 = vector.load %arg8[%c0_156, %c0_157] : memref<1x16xf32, #tpu.memory_space<vmem>>, vector<1x16xf32>
    %123 = vector.broadcast %122 : vector<1x16xf32> to vector<64x16xf32>
    %124 = arith.addf %121, %123 : vector<64x16xf32>
    %cst_158 = arith.constant 0.000000e+00 : f32
    %125 = vector.broadcast %cst_158 : f32 to vector<64x16xf32>
    %126 = arith.maximumf %124, %125 : vector<64x16xf32>
    %c0_159 = arith.constant 0 : index
    %c0_160 = arith.constant 0 : index
    %127 = vector.load %arg9[%c0_159, %c0_160] : memref<16x16xf32, #tpu.memory_space<vmem>>, vector<16x16xf32>
    %cst_161 = arith.constant dense<0.000000e+00> : vector<64x16xf32>
    %128 = tpu.matmul %126, %127, %cst_161 {dimension_numbers = #tpu.dot_dimension_numbers<[1], [0], [0], [1], [0, 0, 1, 1], [], []>} : vector<64x16xf32>, vector<16x16xf32>, vector<64x16xf32> -> vector<64x16xf32>
    %c0_162 = arith.constant 0 : index
    %c0_163 = arith.constant 0 : index
    %129 = vector.load %arg10[%c0_162, %c0_163] : memref<1x16xf32, #tpu.memory_space<vmem>>, vector<1x16xf32>
    %130 = vector.broadcast %129 : vector<1x16xf32> to vector<64x16xf32>
    %131 = arith.addf %128, %130 : vector<64x16xf32>
    %cst_164 = arith.constant 0.000000e+00 : f32
    %132 = vector.broadcast %cst_164 : f32 to vector<64x16xf32>
    %133 = arith.maximumf %131, %132 : vector<64x16xf32>
    %c0_165 = arith.constant 0 : index
    %c0_166 = arith.constant 0 : index
    %134 = vector.load %arg11[%c0_165, %c0_166] : memref<16x21xf32, #tpu.memory_space<vmem>>, vector<16x21xf32>
    %cst_167 = arith.constant dense<0.000000e+00> : vector<64x21xf32>
    %135 = tpu.matmul %133, %134, %cst_167 {dimension_numbers = #tpu.dot_dimension_numbers<[1], [0], [0], [1], [0, 0, 1, 1], [], []>} : vector<64x16xf32>, vector<16x21xf32>, vector<64x21xf32> -> vector<64x21xf32>
    %c0_168 = arith.constant 0 : index
    %c0_169 = arith.constant 0 : index
    %136 = vector.load %arg12[%c0_168, %c0_169] : memref<1x21xf32, #tpu.memory_space<vmem>>, vector<1x21xf32>
    %137 = vector.broadcast %136 : vector<1x21xf32> to vector<64x21xf32>
    %138 = arith.addf %135, %137 : vector<64x21xf32>
    %139 = vector.shape_cast %138 : vector<64x21xf32> to vector<1x64x21xf32>
    %c0_170 = arith.constant 0 : index
    %c0_171 = arith.constant 0 : index
    %c0_172 = arith.constant 0 : index
    %140 = vector.load %arg13[%c0_170, %c0_171, %c0_172] : memref<1x64x21xf32, #tpu.memory_space<vmem>>, vector<1x64x21xf32>
    tpu.vector_store %arg13[%c0_170, %c0_171, %c0_172], %139 {strides = array<i32>} : memref<1x64x21xf32, #tpu.memory_space<vmem>>, vector<1x64x21xf32>,
    return
  }
  func.func @transform_0(%arg0: i32) -> (i32, i32, i32, i32) {
    %c0_i32 = arith.constant 0 : i32
    %c0_i32_0 = arith.constant 0 : i32
    %c0_i32_1 = arith.constant 0 : i32
    %c0_i32_2 = arith.constant 0 : i32
    return %arg0, %c0_i32, %c0_i32_0, %c0_i32_1 : i32, i32, i32, i32
  }
  func.func @transform_1(%arg0: i32) -> (i32, i32, i32, i32) {
    %c0_i32 = arith.constant 0 : i32
    %c0_i32_0 = arith.constant 0 : i32
    %c0_i32_1 = arith.constant 0 : i32
    %c0_i32_2 = arith.constant 0 : i32
    return %arg0, %c0_i32, %c0_i32_0, %c0_i32_1 : i32, i32, i32, i32
  }
  func.func @transform_2(%arg0: i32) -> (i32, i32, i32, i32) {
    %c0_i32 = arith.constant 0 : i32
    %c0_i32_0 = arith.constant 0 : i32
    %c0_i32_1 = arith.constant 0 : i32
    %c0_i32_2 = arith.constant 0 : i32
    return %arg0, %c0_i32, %c0_i32_0, %c0_i32_1 : i32, i32, i32, i32
  }
  func.func @transform_3(%arg0: i32) -> (i32, i32, i32, i32) {
    %c0_i32 = arith.constant 0 : i32
    %c0_i32_0 = arith.constant 0 : i32
    %c0_i32_1 = arith.constant 0 : i32
    %c0_i32_2 = arith.constant 0 : i32
    return %arg0, %c0_i32, %c0_i32_0, %c0_i32_1 : i32, i32, i32, i32
  }
  func.func @transform_4(%arg0: i32) -> (i32, i32) {
    %c0_i32 = arith.constant 0 : i32
    %c0_i32_0 = arith.constant 0 : i32
    %c0_i32_1 = arith.constant 0 : i32
    return %c0_i32, %c0_i32_0 : i32, i32
  }
  func.func @transform_5(%arg0: i32) -> (i32, i32) {
    %c0_i32 = arith.constant 0 : i32
    %c0_i32_0 = arith.constant 0 : i32
    %c0_i32_1 = arith.constant 0 : i32
    return %c0_i32, %c0_i32_0 : i32, i32
  }
  func.func @transform_6(%arg0: i32) -> (i32, i32) {
    %c0_i32 = arith.constant 0 : i32
    %c0_i32_0 = arith.constant 0 : i32
    %c0_i32_1 = arith.constant 0 : i32
    return %c0_i32, %c0_i32_0 : i32, i32
  }
  func.func @transform_7(%arg0: i32) -> (i32, i32) {
    %c0_i32 = arith.constant 0 : i32
    %c0_i32_0 = arith.constant 0 : i32
    %c0_i32_1 = arith.constant 0 : i32
    return %c0_i32, %c0_i32_0 : i32, i32
  }
  func.func @transform_8(%arg0: i32) -> (i32, i32) {
    %c0_i32 = arith.constant 0 : i32
    %c0_i32_0 = arith.constant 0 : i32
    %c0_i32_1 = arith.constant 0 : i32
    return %c0_i32, %c0_i32_0 : i32, i32
  }
  func.func @transform_9(%arg0: i32) -> (i32, i32) {
    %c0_i32 = arith.constant 0 : i32
    %c0_i32_0 = arith.constant 0 : i32
    %c0_i32_1 = arith.constant 0 : i32
    return %c0_i32, %c0_i32_0 : i32, i32
  }
  func.func @transform_10(%arg0: i32) -> (i32, i32) {
    %c0_i32 = arith.constant 0 : i32
    %c0_i32_0 = arith.constant 0 : i32
    %c0_i32_1 = arith.constant 0 : i32
    return %c0_i32, %c0_i32_0 : i32, i32
  }
  func.func @transform_11(%arg0: i32) -> (i32, i32) {
    %c0_i32 = arith.constant 0 : i32
    %c0_i32_0 = arith.constant 0 : i32
    %c0_i32_1 = arith.constant 0 : i32
    return %c0_i32, %c0_i32_0 : i32, i32
  }
  func.func @transform_12(%arg0: i32) -> (i32, i32, i32) {
    %c0_i32 = arith.constant 0 : i32
    %c0_i32_0 = arith.constant 0 : i32
    %c0_i32_1 = arith.constant 0 : i32
    return %arg0, %c0_i32, %c0_i32_0 : i32, i32, i32
  }
}

</mosaic_0001>

<llo_original>
// kernel: _detector_forward.1
$region0: #{_detector_forward.1}
  #allocation0 [shape = 'u32[]', space=smem, size = 0x4, offset = 0x4, fixed_abs, tag = 'smem constant byte address 0x4 - core index']
  #allocation1 [shape = 'u32[144,128]{1,0:T(1,128)}', space=vmem, size = 0x12000, scoped, tag = 'internal scratch']
  %s0 = inlined_call_operand.vmem [shape: f32[2,9,9,4], index: 0, kind: input, shape index: {}]
  %s1 = inlined_call_operand.vmem [shape: f32[2,9,9,4], index: 1, kind: input, shape index: {}]
  %s2 = inlined_call_operand.vmem [shape: f32[2,9,9,4], index: 2, kind: input, shape index: {}]
  %s3 = inlined_call_operand.vmem [shape: f32[2,9,9,4], index: 3, kind: input, shape index: {}]
  %s4 = inlined_call_operand.vmem [shape: f32[36,8], index: 4, kind: input, shape index: {}]
  %s5 = inlined_call_operand.vmem [shape: f32[1,8], index: 5, kind: input, shape index: {}]
  %s6 = inlined_call_operand.vmem [shape: f32[72,16], index: 6, kind: input, shape index: {}]
  %s7 = inlined_call_operand.vmem [shape: f32[1,16], index: 7, kind: input, shape index: {}]
  %s8 = inlined_call_operand.vmem [shape: f32[16,16], index: 8, kind: input, shape index: {}]
  %s9 = inlined_call_operand.vmem [shape: f32[1,16], index: 9, kind: input, shape index: {}]
  %s10 = inlined_call_operand.vmem [shape: f32[16,21], index: 10, kind: input, shape index: {}]
  %s11 = inlined_call_operand.vmem [shape: f32[1,21], index: 11, kind: input, shape index: {}]
  %s12 = inlined_call_operand.hbm [shape: f32[2,64,21], index: 12, kind: output, shape index: {}]
  %s13 = sld [smem:[#allocation0]]
  $region81: #{_detector_forward.1} parent=0
    _
  %s15 = ssub.s32 1, %s13
  %s16 = scalar_select 0, %s15, %s13
  $region1: #{_detector_forward.1} parent=0
    #allocation2 [shape = 'u8[65536]{0}', space=vmem, size = 0x10000, scoped, tag = 'output window, operand 0']
    #allocation3 [shape = 's32[2]{0}', space=sflag, size = 0x8, scoped, tag = 'scoped memory for _detector_forward.1']
    %17 = vsyncpa [#allocation3], 0
    %s18 = scalar_lea.sflag [#allocation3], 1
    %19 = vsyncpa %s18, 0
    loop: start=0, step=1, limit=4
    $region2: #{_detector_forward.1} parent=1 // loop_pre_header
      _
    $region3: #{_detector_forward.1} parent=1 // loop_header
      %s21 = sphi 0, %s25
      %p22 = scmp.ge.s32.totalorder %s21, 4
      %s31 = sphi 0, %s33
      %s34 = sphi 0, %s31
      %s35 = sphi 0, %s34
      %s51 = sphi 0, %s35
      %s57 = sphi 0, %s59
      %s60 = sphi 0, %s57
      %s61 = sphi 0, %s60
      %s77 = sphi 0, %s61
      %s83 = sphi 0, %s85
      %s86 = sphi 0, %s83
      %s87 = sphi 0, %s86
      %s103 = sphi 0, %s87
      %s109 = sphi 0, %s111
      %s112 = sphi 0, %s109
      %s113 = sphi 0, %s112
      %s129 = sphi 0, %s113
      %s133 = sphi 0, %s133
      %s135 = sphi 0, %s133
      %s136 = sphi 0, %s135
      %s150 = sphi 0, %s136
      %s154 = sphi 0, %s154
      %s156 = sphi 0, %s154
      %s157 = sphi 0, %s156
      %s171 = sphi 0, %s157
      %s175 = sphi 0, %s175
      %s177 = sphi 0, %s175
      %s178 = sphi 0, %s177
      %s192 = sphi 0, %s178
      %s196 = sphi 0, %s196
      %s198 = sphi 0, %s196
      %s199 = sphi 0, %s198
      %s213 = sphi 0, %s199
      %s217 = sphi 0, %s217
      %s219 = sphi 0, %s217
      %s220 = sphi 0, %s219
      %s234 = sphi 0, %s220
      %s238 = sphi 0, %s238
      %s240 = sphi 0, %s238
      %s241 = sphi 0, %s240
      %s255 = sphi 0, %s241
      %s259 = sphi 0, %s259
      %s261 = sphi 0, %s259
      %s262 = sphi 0, %s261
      %s276 = sphi 0, %s262
      %s280 = sphi 0, %s280
      %s282 = sphi 0, %s280
      %s283 = sphi 0, %s282
      %s297 = sphi 0, %s283
      %s303 = sphi 0, %s305
      %s306 = sphi 0, %s303
      %s307 = sphi 0, %s306
      %s323 = sphi 0, %s307
    $region4: #{_detector_forward.1} parent=1 // loop_header_branch
      %24 = sbr.rel (%p22) target = $region8
    $region5: #{_detector_forward.1} parent=1 // loop_body
      %s26 = ssub.s32 %s21, 1
      %s27 = ssub.s32 %s21, 2
      %s28 = sadd.s32 %s21, 1
      %s29 = ssub.s32 %s21, %s28
      %p30 = scmp.eq.s32.totalorder %s29, 0
      %s32 = sadd.s32 %s31, 1
      %s33 = scalar_select %p30, %s31, %s32
      %p36 = pneg %p30
      %p37 = scmp.eq.s32.totalorder %s21, 1
      %p38 = por %p36, %p37
      %p39 = scmp.ne.s32.totalorder %s31, %s34
      %p40 = scmp.eq.s32.totalorder %s21, 0
      %p41 = por %p39, %p40
      %p42 = scmp.ne.s32.totalorder %s31, %s34
      %p43 = scmp.eq.s32.totalorder %s26, 1
      %p44 = por %p42, %p43
      %p45 = scmp.ne.s32.totalorder %s34, %s35
      %p46 = scmp.eq.s32.totalorder %s26, 0
      %p47 = por %p45, %p46
      %p48 = scmp.ne.s32.totalorder %s34, %s35
      %p49 = scmp.eq.s32.totalorder %s27, 1
      %p50 = por %p48, %p49
      %p52 = scmp.ne.s32.totalorder %s35, %s51
      %p53 = scmp.eq.s32.totalorder %s27, 0
      %p54 = por %p52, %p53
      %s55 = ssub.s32 %s21, %s28
      %p56 = scmp.eq.s32.totalorder %s55, 0
      %s58 = sadd.s32 %s57, 1
      %s59 = scalar_select %p56, %s57, %s58
      %p62 = pneg %p56
      %p63 = scmp.eq.s32.totalorder %s21, 1
      %p64 = por %p62, %p63
      %p65 = scmp.ne.s32.totalorder %s57, %s60
      %p66 = scmp.eq.s32.totalorder %s21, 0
      %p67 = por %p65, %p66
      %p68 = scmp.ne.s32.totalorder %s57, %s60
      %p69 = scmp.eq.s32.totalorder %s26, 1
      %p70 = por %p68, %p69
      %p71 = scmp.ne.s32.totalorder %s60, %s61
      %p72 = scmp.eq.s32.totalorder %s26, 0
      %p73 = por %p71, %p72
      %p74 = scmp.ne.s32.totalorder %s60, %s61
      %p75 = scmp.eq.s32.totalorder %s27, 1
      %p76 = por %p74, %p75
      %p78 = scmp.ne.s32.totalorder %s61, %s77
      %p79 = scmp.eq.s32.totalorder %s27, 0
      %p80 = por %p78, %p79
      %s81 = ssub.s32 %s21, %s28
      %p82 = scmp.eq.s32.totalorder %s81, 0
      %s84 = sadd.s32 %s83, 1
      %s85 = scalar_select %p82, %s83, %s84
      %p88 = pneg %p82
      %p89 = scmp.eq.s32.totalorder %s21, 1
      %p90 = por %p88, %p89
      %p91 = scmp.ne.s32.totalorder %s83, %s86
      %p92 = scmp.eq.s32.totalorder %s21, 0
      %p93 = por %p91, %p92
      %p94 = scmp.ne.s32.totalorder %s83, %s86
      %p95 = scmp.eq.s32.totalorder %s26, 1
      %p96 = por %p94, %p95
      %p97 = scmp.ne.s32.totalorder %s86, %s87
      %p98 = scmp.eq.s32.totalorder %s26, 0
      %p99 = por %p97, %p98
      %p100 = scmp.ne.s32.totalorder %s86, %s87
      %p101 = scmp.eq.s32.totalorder %s27, 1
      %p102 = por %p100, %p101
      %p104 = scmp.ne.s32.totalorder %s87, %s103
      %p105 = scmp.eq.s32.totalorder %s27, 0
      %p106 = por %p104, %p105
      %s107 = ssub.s32 %s21, %s28
      %p108 = scmp.eq.s32.totalorder %s107, 0
      %s110 = sadd.s32 %s109, 1
      %s111 = scalar_select %p108, %s109, %s110
      %p114 = pneg %p108
      %p115 = scmp.eq.s32.totalorder %s21, 1
      %p116 = por %p114, %p115
      %p117 = scmp.ne.s32.totalorder %s109, %s112
      %p118 = scmp.eq.s32.totalorder %s21, 0
      %p119 = por %p117, %p118
      %p120 = scmp.ne.s32.totalorder %s109, %s112
      %p121 = scmp.eq.s32.totalorder %s26, 1
      %p122 = por %p120, %p121
      %p123 = scmp.ne.s32.totalorder %s112, %s113
      %p124 = scmp.eq.s32.totalorder %s26, 0
      %p125 = por %p123, %p124
      %p126 = scmp.ne.s32.totalorder %s112, %s113
      %p127 = scmp.eq.s32.totalorder %s27, 1
      %p128 = por %p126, %p127
      %p130 = scmp.ne.s32.totalorder %s113, %s129
      %p131 = scmp.eq.s32.totalorder %s27, 0
      %p132 = por %p130, %p131
      %s134 = sadd.s32 %s133, 1
      %p137 = scmp.eq.s32.totalorder %s21, 1
      %p138 = scmp.ne.s32.totalorder %s133, %s135
      %p139 = scmp.eq.s32.totalorder %s21, 0
      %p140 = por %p138, %p139
      %p141 = scmp.ne.s32.totalorder %s133, %s135
      %p142 = scmp.eq.s32.totalorder %s26, 1
      %p143 = por %p141, %p142
      %p144 = scmp.ne.s32.totalorder %s135, %s136
      %p145 = scmp.eq.s32.totalorder %s26, 0
      %p146 = por %p144, %p145
      %p147 = scmp.ne.s32.totalorder %s135, %s136
      %p148 = scmp.eq.s32.totalorder %s27, 1
      %p149 = por %p147, %p148
      %p151 = scmp.ne.s32.totalorder %s136, %s150
      %p152 = scmp.eq.s32.totalorder %s27, 0
      %p153 = por %p151, %p152
      %s155 = sadd.s32 %s154, 1
      %p158 = scmp.eq.s32.totalorder %s21, 1
      %p159 = scmp.ne.s32.totalorder %s154, %s156
      %p160 = scmp.eq.s32.totalorder %s21, 0
      %p161 = por %p159, %p160
      %p162 = scmp.ne.s32.totalorder %s154, %s156
      %p163 = scmp.eq.s32.totalorder %s26, 1
      %p164 = por %p162, %p163
      %p165 = scmp.ne.s32.totalorder %s156, %s157
      %p166 = scmp.eq.s32.totalorder %s26, 0
      %p167 = por %p165, %p166
      %p168 = scmp.ne.s32.totalorder %s156, %s157
      %p169 = scmp.eq.s32.totalorder %s27, 1
      %p170 = por %p168, %p169
      %p172 = scmp.ne.s32.totalorder %s157, %s171
      %p173 = scmp.eq.s32.totalorder %s27, 0
      %p174 = por %p172, %p173
      %s176 = sadd.s32 %s175, 1
      %p179 = scmp.eq.s32.totalorder %s21, 1
      %p180 = scmp.ne.s32.totalorder %s175, %s177
      %p181 = scmp.eq.s32.totalorder %s21, 0
      %p182 = por %p180, %p181
      %p183 = scmp.ne.s32.totalorder %s175, %s177
      %p184 = scmp.eq.s32.totalorder %s26, 1
      %p185 = por %p183, %p184
      %p186 = scmp.ne.s32.totalorder %s177, %s178
      %p187 = scmp.eq.s32.totalorder %s26, 0
      %p188 = por %p186, %p187
      %p189 = scmp.ne.s32.totalorder %s177, %s178
      %p190 = scmp.eq.s32.totalorder %s27, 1
      %p191 = por %p189, %p190
      %p193 = scmp.ne.s32.totalorder %s178, %s192
      %p194 = scmp.eq.s32.totalorder %s27, 0
      %p195 = por %p193, %p194
      %s197 = sadd.s32 %s196, 1
      %p200 = scmp.eq.s32.totalorder %s21, 1
      %p201 = scmp.ne.s32.totalorder %s196, %s198
      %p202 = scmp.eq.s32.totalorder %s21, 0
      %p203 = por %p201, %p202
      %p204 = scmp.ne.s32.totalorder %s196, %s198
      %p205 = scmp.eq.s32.totalorder %s26, 1
      %p206 = por %p204, %p205
      %p207 = scmp.ne.s32.totalorder %s198, %s199
      %p208 = scmp.eq.s32.totalorder %s26, 0
      %p209 = por %p207, %p208
      %p210 = scmp.ne.s32.totalorder %s198, %s199
      %p211 = scmp.eq.s32.totalorder %s27, 1
      %p212 = por %p210, %p211
      %p214 = scmp.ne.s32.totalorder %s199, %s213
      %p215 = scmp.eq.s32.totalorder %s27, 0
      %p216 = por %p214, %p215
      %s218 = sadd.s32 %s217, 1
      %p221 = scmp.eq.s32.totalorder %s21, 1
      %p222 = scmp.ne.s32.totalorder %s217, %s219
      %p223 = scmp.eq.s32.totalorder %s21, 0
      %p224 = por %p222, %p223
      %p225 = scmp.ne.s32.totalorder %s217, %s219
      %p226 = scmp.eq.s32.totalorder %s26, 1
      %p227 = por %p225, %p226
      %p228 = scmp.ne.s32.totalorder %s219, %s220
      %p229 = scmp.eq.s32.totalorder %s26, 0
      %p230 = por %p228, %p229
      %p231 = scmp.ne.s32.totalorder %s219, %s220
      %p232 = scmp.eq.s32.totalorder %s27, 1
      %p233 = por %p231, %p232
      %p235 = scmp.ne.s32.totalorder %s220, %s234
      %p236 = scmp.eq.s32.totalorder %s27, 0
      %p237 = por %p235, %p236
      %s239 = sadd.s32 %s238, 1
      %p242 = scmp.eq.s32.totalorder %s21, 1
      %p243 = scmp.ne.s32.totalorder %s238, %s240
      %p244 = scmp.eq.s32.totalorder %s21, 0
      %p245 = por %p243, %p244
      %p246 = scmp.ne.s32.totalorder %s238, %s240
      %p247 = scmp.eq.s32.totalorder %s26, 1
      %p248 = por %p246, %p247
      %p249 = scmp.ne.s32.totalorder %s240, %s241
      %p250 = scmp.eq.s32.totalorder %s26, 0
      %p251 = por %p249, %p250
      %p252 = scmp.ne.s32.totalorder %s240, %s241
      %p253 = scmp.eq.s32.totalorder %s27, 1
      %p254 = por %p252, %p253
      %p256 = scmp.ne.s32.totalorder %s241, %s255
      %p257 = scmp.eq.s32.totalorder %s27, 0
      %p258 = por %p256, %p257
      %s260 = sadd.s32 %s259, 1
      %p263 = scmp.eq.s32.totalorder %s21, 1
      %p264 = scmp.ne.s32.totalorder %s259, %s261
      %p265 = scmp.eq.s32.totalorder %s21, 0
      %p266 = por %p264, %p265
      %p267 = scmp.ne.s32.totalorder %s259, %s261
      %p268 = scmp.eq.s32.totalorder %s26, 1
      %p269 = por %p267, %p268
      %p270 = scmp.ne.s32.totalorder %s261, %s262
      %p271 = scmp.eq.s32.totalorder %s26, 0
      %p272 = por %p270, %p271
      %p273 = scmp.ne.s32.totalorder %s261, %s262
      %p274 = scmp.eq.s32.totalorder %s27, 1
      %p275 = por %p273, %p274
      %p277 = scmp.ne.s32.totalorder %s262, %s276
      %p278 = scmp.eq.s32.totalorder %s27, 0
      %p279 = por %p277, %p278
      %s281 = sadd.s32 %s280, 1
      %p284 = scmp.eq.s32.totalorder %s21, 1
      %p285 = scmp.ne.s32.totalorder %s280, %s282
      %p286 = scmp.eq.s32.totalorder %s21, 0
      %p287 = por %p285, %p286
      %p288 = scmp.ne.s32.totalorder %s280, %s282
      %p289 = scmp.eq.s32.totalorder %s26, 1
      %p290 = por %p288, %p289
      %p291 = scmp.ne.s32.totalorder %s282, %s283
      %p292 = scmp.eq.s32.totalorder %s26, 0
      %p293 = por %p291, %p292
      %p294 = scmp.ne.s32.totalorder %s282, %s283
      %p295 = scmp.eq.s32.totalorder %s27, 1
      %p296 = por %p294, %p295
      %p298 = scmp.ne.s32.totalorder %s283, %s297
      %p299 = scmp.eq.s32.totalorder %s27, 0
      %p300 = por %p298, %p299
      %s301 = ssub.s32 %s21, %s28
      %p302 = scmp.eq.s32.totalorder %s301, 0
      %s304 = sadd.s32 %s303, 1
      %s305 = scalar_select %p302, %s303, %s304
      %p308 = pneg %p302
      %p309 = scmp.eq.s32.totalorder %s21, 1
      %p310 = por %p308, %p309
      %p311 = scmp.ne.s32.totalorder %s303, %s306
      %p312 = scmp.eq.s32.totalorder %s21, 0
      %p313 = por %p311, %p312
      %p314 = scmp.ne.s32.totalorder %s303, %s306
      %p315 = scmp.eq.s32.totalorder %s26, 1
      %p316 = por %p314, %p315
      %p317 = scmp.ne.s32.totalorder %s306, %s307
      %p318 = scmp.eq.s32.totalorder %s26, 0
      %p319 = por %p317, %p318
      %p320 = scmp.ne.s32.totalorder %s306, %s307
      %p321 = scmp.eq.s32.totalorder %s27, 1
      %p322 = por %p320, %p321
      %p324 = scmp.ne.s32.totalorder %s307, %s323
      %p325 = scmp.eq.s32.totalorder %s27, 0
      %p326 = por %p324, %p325
      %p327 = scmp.le.s32.totalorder 1, %s21
      %p328 = scmp.lt.s32.totalorder %s21, 3
      %p329 = pnand %p327, %p328
      %p330 = pneg %p329
      // Predicated region
      $region9: #{_detector_forward.1} parent=5 // pred_check
        _
      $region10: #{_detector_forward.1} parent=5 // pred_check_branch
        %332 = sbr.rel (%p329) target = $region12
      $region11: #{_detector_forward.1} parent=5 // pred_region
        %s333 = ssub.s32 %s21, 1
        // Predicated region
        $region13: #{_detector_forward.1} parent=11 // pred_check
          %p334 = pneg %p146
        $region14: #{_detector_forward.1} parent=11 // pred_check_branch
          %336 = sbr.rel (%p334) target = $region16
        $region15: #{_detector_forward.1} parent=11 // pred_region
          _
        $region16: #{_detector_forward.1} parent=11 // pred_fallthru
          _
        // Predicated region
        $region17: #{_detector_forward.1} parent=11 // pred_check
          %p337 = pneg %p167
        $region18: #{_detector_forward.1} parent=11 // pred_check_branch
          %339 = sbr.rel (%p337) target = $region20
        $region19: #{_detector_forward.1} parent=11 // pred_region
          _
        $region20: #{_detector_forward.1} parent=11 // pred_fallthru
          _
        // Predicated region
        $region21: #{_detector_forward.1} parent=11 // pred_check
          %p340 = pneg %p188
        $region22: #{_detector_forward.1} parent=11 // pred_check_branch
          %342 = sbr.rel (%p340) target = $region24
        $region23: #{_detector_forward.1} parent=11 // pred_region
          _
        $region24: #{_detector_forward.1} parent=11 // pred_fallthru
          _
        // Predicated region
        $region25: #{_detector_forward.1} parent=11 // pred_check
          %p343 = pneg %p209
        $region26: #{_detector_forward.1} parent=11 // pred_check_branch
          %345 = sbr.rel (%p343) target = $region28
        $region27: #{_detector_forward.1} parent=11 // pred_region
          _
        $region28: #{_detector_forward.1} parent=11 // pred_fallthru
          _
        // Predicated region
        $region29: #{_detector_forward.1} parent=11 // pred_check
          %p346 = pneg %p230
        $region30: #{_detector_forward.1} parent=11 // pred_check_branch
          %348 = sbr.rel (%p346) target = $region32
        $region31: #{_detector_forward.1} parent=11 // pred_region
          _
        $region32: #{_detector_forward.1} parent=11 // pred_fallthru
          _
        // Predicated region
        $region33: #{_detector_forward.1} parent=11 // pred_check
          %p349 = pneg %p251
        $region34: #{_detector_forward.1} parent=11 // pred_check_branch
          %351 = sbr.rel (%p349) target = $region36
        $region35: #{_detector_forward.1} parent=11 // pred_region
          _
        $region36: #{_detector_forward.1} parent=11 // pred_fallthru
          _
        // Predicated region
        $region37: #{_detector_forward.1} parent=11 // pred_check
          %p352 = pneg %p272
        $region38: #{_detector_forward.1} parent=11 // pred_check_branch
          %354 = sbr.rel (%p352) target = $region40
        $region39: #{_detector_forward.1} parent=11 // pred_region
          _
        $region40: #{_detector_forward.1} parent=11 // pred_fallthru
          _
        // Predicated region
        $region41: #{_detector_forward.1} parent=11 // pred_check
          %p355 = pneg %p293
        $region42: #{_detector_forward.1} parent=11 // pred_check_branch
          %357 = sbr.rel (%p355) target = $region44
        $region43: #{_detector_forward.1} parent=11 // pred_region
          _
        $region44: #{_detector_forward.1} parent=11 // pred_fallthru
          _
      $region12: #{_detector_forward.1} parent=5 // pred_fallthru
        _
      %p358 = scmp.lt.s32.totalorder %s21, 2
      // Predicated region
      $region45: #{_detector_forward.1} parent=5 // pred_check
        %p359 = pneg %p358
      $region46: #{_detector_forward.1} parent=5 // pred_check_branch
        %361 = sbr.rel (%p359) target = $region48
      $region47: #{_detector_forward.1} parent=5 // pred_region
        // Predicated region
        $region49: #{_detector_forward.1} parent=47 // pred_check
          %p362 = pneg %p41
        $region50: #{_detector_forward.1} parent=47 // pred_check_branch
          %364 = sbr.rel (%p362) target = $region52
        $region51: #{_detector_forward.1} parent=47 // pred_region
          %p365 = scmp.lt.s32.totalorder %s21, 1
          %s366 = scalar_select %p365, %s21, 1
          %s367 = smul.addr %s366, 18
          %s368 = smul.addr %s367, 8
          %s369 = scalar_lea.vmem %s0, %s368
        $region52: #{_detector_forward.1} parent=47 // pred_fallthru
          _
        // Predicated region
        $region53: #{_detector_forward.1} parent=47 // pred_check
          %p370 = pneg %p67
        $region54: #{_detector_forward.1} parent=47 // pred_check_branch
          %372 = sbr.rel (%p370) target = $region56
        $region55: #{_detector_forward.1} parent=47 // pred_region
          %p373 = scmp.lt.s32.totalorder %s21, 1
          %s374 = scalar_select %p373, %s21, 1
          %s375 = smul.addr %s374, 18
          %s376 = smul.addr %s375, 8
          %s377 = scalar_lea.vmem %s1, %s376
        $region56: #{_detector_forward.1} parent=47 // pred_fallthru
          _
        // Predicated region
        $region57: #{_detector_forward.1} parent=47 // pred_check
          %p378 = pneg %p93
        $region58: #{_detector_forward.1} parent=47 // pred_check_branch
          %380 = sbr.rel (%p378) target = $region60
        $region59: #{_detector_forward.1} parent=47 // pred_region
          %p381 = scmp.lt.s32.totalorder %s21, 1
          %s382 = scalar_select %p381, %s21, 1
          %s383 = smul.addr %s382, 18
          %s384 = smul.addr %s383, 8
          %s385 = scalar_lea.vmem %s2, %s384
        $region60: #{_detector_forward.1} parent=47 // pred_fallthru
          _
        // Predicated region
        $region61: #{_detector_forward.1} parent=47 // pred_check
          %p386 = pneg %p119
        $region62: #{_detector_forward.1} parent=47 // pred_check_branch
          %388 = sbr.rel (%p386) target = $region64
        $region63: #{_detector_forward.1} parent=47 // pred_region
          %p389 = scmp.lt.s32.totalorder %s21, 1
          %s390 = scalar_select %p389, %s21, 1
          %s391 = smul.addr %s390, 18
          %s392 = smul.addr %s391, 8
          %s393 = scalar_lea.vmem %s3, %s392
        $region64: #{_detector_forward.1} parent=47 // pred_fallthru
          _
      $region48: #{_detector_forward.1} parent=5 // pred_fallthru
        _
      %p394 = scmp.le.s32.totalorder 1, %s21
      %p395 = scmp.lt.s32.totalorder %s21, 3
      %p396 = pnand %p394, %p395
      %p397 = pneg %p396
      // Predicated region
      $region65: #{_detector_forward.1} parent=5 // pred_check
        _
      $region66: #{_detector_forward.1} parent=5 // pred_check_branch
        %399 = sbr.rel (%p396) target = $region68
      $region67: #{_detector_forward.1} parent=5 // pred_region
        %s400 = ssub.s32 %s21, 1
        %p401 = scmp.lt.s32.totalorder %s26, 1
        %s402 = scalar_select %p401, %s26, 1
        %s403 = smul.addr %s402, 18
        %s404 = smul.addr %s403, 8
        %s405 = scalar_lea.vmem %s0, %s404
        %p406 = pneg %p47
        %p407 = pneg %p44
        %p408 = scmp.lt.s32.totalorder %s26, 1
        %s409 = scalar_select %p408, %s26, 1
        %s410 = smul.addr %s409, 18
        %s411 = smul.addr %s410, 8
        %s412 = scalar_lea.vmem %s1, %s411
        %p413 = pneg %p73
        %p414 = pneg %p70
        %p415 = scmp.lt.s32.totalorder %s26, 1
        %s416 = scalar_select %p415, %s26, 1
        %s417 = smul.addr %s416, 18
        %s418 = smul.addr %s417, 8
        %s419 = scalar_lea.vmem %s2, %s418
        %p420 = pneg %p99
        %p421 = pneg %p96
        %p422 = scmp.lt.s32.totalorder %s26, 1
        %s423 = scalar_select %p422, %s26, 1
        %s424 = smul.addr %s423, 18
        %s425 = smul.addr %s424, 8
        %s426 = scalar_lea.vmem %s3, %s425
        %p427 = pneg %p125
        %p428 = pneg %p122
        %p429 = pneg %p146
        %p430 = pneg %p143
        %p431 = pneg %p167
        %p432 = pneg %p164
        %p433 = pneg %p188
        %p434 = pneg %p185
        %p435 = pneg %p209
        %p436 = pneg %p206
        %p437 = pneg %p230
        %p438 = pneg %p227
        %p439 = pneg %p251
        %p440 = pneg %p248
        %p441 = pneg %p272
        %p442 = pneg %p269
        %p443 = pneg %p293
        %p444 = pneg %p290
        %p445 = pneg %p319
        %p446 = pneg %p316
        %s447 = sand.u32 %s306, 1
        %s448 = scalar_lea.sflag [#allocation3], %s447
        %s449 = sand.u32 %s306, 1
        %s450 = smul.addr %s449, 64
        %s451 = scalar_lea.vmem [#allocation2], %s450
        %p452 = scmp.lt.s32.totalorder %s26, 1
        %s453 = scalar_select %p452, %s26, 1
        %s454 = smul.addr %s453, 18
        %s455 = smul.addr %s454, 8
        %s456 = scalar_lea.vmem %s0, %s455
        %p457 = scmp.lt.s32.totalorder %s26, 1
        %s458 = scalar_select %p457, %s26, 1
        %s459 = smul.addr %s458, 18
        %s460 = smul.addr %s459, 8
        %s461 = scalar_lea.vmem %s1, %s460
        %p462 = scmp.lt.s32.totalorder %s26, 1
        %s463 = scalar_select %p462, %s26, 1
        %s464 = smul.addr %s463, 18
        %s465 = smul.addr %s464, 8
        %s466 = scalar_lea.vmem %s2, %s465
        %p467 = scmp.lt.s32.totalorder %s26, 1
        %s468 = scalar_select %p467, %s26, 1
        %s469 = smul.addr %s468, 18
        %s470 = smul.addr %s469, 8
        %s471 = scalar_lea.vmem %s3, %s470
        %v472 = vld [vmem:[%s456] sm:$0xff]
        %v473 = vld [vmem:[%s456 + $0x10] sm:$0xff]
        %v474 = vld [vmem:[%s456 + $0x20] sm:$0xff]
        %v475 = vld [vmem:[%s456 + $0x30] sm:$0xff]
        %v476 = vld [vmem:[%s456 + $0x40] sm:$0xff]
        %v477 = vld [vmem:[%s456 + $0x50] sm:$0xff]
        %v478 = vld [vmem:[%s456 + $0x60] sm:$0xff]
        %v479 = vld [vmem:[%s456 + $0x70] sm:$0xff]
        %v480 = vld [vmem:[%s461] sm:$0xff]
        %v481 = vld [vmem:[%s461 + $0x10] sm:$0xff]
        %v482 = vld [vmem:[%s461 + $0x20] sm:$0xff]
        %v483 = vld [vmem:[%s461 + $0x30] sm:$0xff]
        %v484 = vld [vmem:[%s461 + $0x40] sm:$0xff]
        %v485 = vld [vmem:[%s461 + $0x50] sm:$0xff]
        %v486 = vld [vmem:[%s461 + $0x60] sm:$0xff]
        %v487 = vld [vmem:[%s461 + $0x70] sm:$0xff]
        %v488 = vld [vmem:[%s456 + $0x1] sm:$0xff]
        %v489 = vld [vmem:[%s456 + $0x11] sm:$0xff]
        %v490 = vld [vmem:[%s456 + $0x21] sm:$0xff]
        %v491 = vld [vmem:[%s456 + $0x31] sm:$0xff]
        %v492 = vld [vmem:[%s456 + $0x41] sm:$0xff]
        %v493 = vld [vmem:[%s456 + $0x51] sm:$0xff]
        %v494 = vld [vmem:[%s456 + $0x61] sm:$0xff]
        %v495 = vld [vmem:[%s456 + $0x71] sm:$0xff]
        %v496 = vld [vmem:[%s466] sm:$0xff]
        %v497 = vld [vmem:[%s466 + $0x10] sm:$0xff]
        %v498 = vld [vmem:[%s466 + $0x20] sm:$0xff]
        %v499 = vld [vmem:[%s466 + $0x30] sm:$0xff]
        %v500 = vld [vmem:[%s466 + $0x40] sm:$0xff]
        %v501 = vld [vmem:[%s466 + $0x50] sm:$0xff]
        %v502 = vld [vmem:[%s466 + $0x60] sm:$0xff]
        %v503 = vld [vmem:[%s466 + $0x70] sm:$0xff]
        %v504 = vld [vmem:[%s471] sm:$0xff]
        %v505 = vld [vmem:[%s471 + $0x10] sm:$0xff]
        %v506 = vld [vmem:[%s471 + $0x20] sm:$0xff]
        %v507 = vld [vmem:[%s471 + $0x30] sm:$0xff]
        %v508 = vld [vmem:[%s471 + $0x40] sm:$0xff]
        %v509 = vld [vmem:[%s471 + $0x50] sm:$0xff]
        %v510 = vld [vmem:[%s471 + $0x60] sm:$0xff]
        %v511 = vld [vmem:[%s471 + $0x70] sm:$0xff]
        %v512 = vld [vmem:[%s466 + $0x1] sm:$0xff]
        %v513 = vld [vmem:[%s466 + $0x11] sm:$0xff]
        %v514 = vld [vmem:[%s466 + $0x21] sm:$0xff]
        %v515 = vld [vmem:[%s466 + $0x31] sm:$0xff]
        %v516 = vld [vmem:[%s466 + $0x41] sm:$0xff]
        %v517 = vld [vmem:[%s466 + $0x51] sm:$0xff]
        %v518 = vld [vmem:[%s466 + $0x61] sm:$0xff]
        %v519 = vld [vmem:[%s466 + $0x71] sm:$0xff]
        %s520 = scalar_lea.vmem %s456, 16
        %v521 = vld [vmem:[%s520] sm:$0xff]
        %v522 = vld [vmem:[%s520 + $0x10] sm:$0xff]
        %v523 = vld [vmem:[%s520 + $0x20] sm:$0xff]
        %v524 = vld [vmem:[%s520 + $0x30] sm:$0xff]
        %v525 = vld [vmem:[%s520 + $0x40] sm:$0xff]
        %v526 = vld [vmem:[%s520 + $0x50] sm:$0xff]
        %v527 = vld [vmem:[%s520 + $0x60] sm:$0xff]
        %v528 = vld [vmem:[%s520 + $0x70] sm:$0xff]
        %s529 = scalar_lea.vmem %s461, 16
        %v530 = vld [vmem:[%s529] sm:$0xff]
        %v531 = vld [vmem:[%s529 + $0x10] sm:$0xff]
        %v532 = vld [vmem:[%s529 + $0x20] sm:$0xff]
        %v533 = vld [vmem:[%s529 + $0x30] sm:$0xff]
        %v534 = vld [vmem:[%s529 + $0x40] sm:$0xff]
        %v535 = vld [vmem:[%s529 + $0x50] sm:$0xff]
        %v536 = vld [vmem:[%s529 + $0x60] sm:$0xff]
        %v537 = vld [vmem:[%s529 + $0x70] sm:$0xff]
        %v538 = vld [vmem:[%s520 + $0x1] sm:$0xff]
        %v539 = vld [vmem:[%s520 + $0x11] sm:$0xff]
        %v540 = vld [vmem:[%s520 + $0x21] sm:$0xff]
        %v541 = vld [vmem:[%s520 + $0x31] sm:$0xff]
        %v542 = vld [vmem:[%s520 + $0x41] sm:$0xff]
        %v543 = vld [vmem:[%s520 + $0x51] sm:$0xff]
        %v544 = vld [vmem:[%s520 + $0x61] sm:$0xff]
        %v545 = vld [vmem:[%s520 + $0x71] sm:$0xff]
        %554 = vrot.lane.b32.xlu0 %v480, 4
        %v555 = vpop.permute.xlu0 %554
        %556 = vrot.lane.b32.xlu0 %v481, 4
        %v557 = vpop.permute.xlu0 %556
        %558 = vrot.lane.b32.xlu0 %v482, 4
        %v559 = vpop.permute.xlu0 %558
        %560 = vrot.lane.b32.xlu0 %v483, 4
        %v561 = vpop.permute.xlu0 %560
        %562 = vrot.lane.b32.xlu0 %v484, 4
        %v563 = vpop.permute.xlu0 %562
        %564 = vrot.lane.b32.xlu0 %v485, 4
        %v565 = vpop.permute.xlu0 %564
        %566 = vrot.lane.b32.xlu0 %v486, 4
        %v567 = vpop.permute.xlu0 %566
        %568 = vrot.lane.b32.xlu0 %v487, 4
        %v569 = vpop.permute.xlu0 %568
        %586 = vrot.lane.b32.xlu0 %v488, 8
        %v587 = vpop.permute.xlu0 %586
        %588 = vrot.lane.b32.xlu0 %v489, 8
        %v589 = vpop.permute.xlu0 %588
        %590 = vrot.lane.b32.xlu0 %v490, 8
        %v591 = vpop.permute.xlu0 %590
        %592 = vrot.lane.b32.xlu0 %v491, 8
        %v593 = vpop.permute.xlu0 %592
        %594 = vrot.lane.b32.xlu0 %v492, 8
        %v595 = vpop.permute.xlu0 %594
        %596 = vrot.lane.b32.xlu0 %v493, 8
        %v597 = vpop.permute.xlu0 %596
        %598 = vrot.lane.b32.xlu0 %v494, 8
        %v599 = vpop.permute.xlu0 %598
        %600 = vrot.lane.b32.xlu0 %v495, 8
        %v601 = vpop.permute.xlu0 %600
        %618 = vrot.lane.b32.xlu0 %v496, 12
        %v619 = vpop.permute.xlu0 %618
        %620 = vrot.lane.b32.xlu0 %v497, 12
        %v621 = vpop.permute.xlu0 %620
        %622 = vrot.lane.b32.xlu0 %v498, 12
        %v623 = vpop.permute.xlu0 %622
        %624 = vrot.lane.b32.xlu0 %v499, 12
        %v625 = vpop.permute.xlu0 %624
        %626 = vrot.lane.b32.xlu0 %v500, 12
        %v627 = vpop.permute.xlu0 %626
        %628 = vrot.lane.b32.xlu0 %v501, 12
        %v629 = vpop.permute.xlu0 %628
        %630 = vrot.lane.b32.xlu0 %v502, 12
        %v631 = vpop.permute.xlu0 %630
        %632 = vrot.lane.b32.xlu0 %v503, 12
        %v633 = vpop.permute.xlu0 %632
        %650 = vrot.lane.b32.xlu0 %v504, 16
        %v651 = vpop.permute.xlu0 %650
        %652 = vrot.lane.b32.xlu0 %v505, 16
        %v653 = vpop.permute.xlu0 %652
        %654 = vrot.lane.b32.xlu0 %v506, 16
        %v655 = vpop.permute.xlu0 %654
        %656 = vrot.lane.b32.xlu0 %v507, 16
        %v657 = vpop.permute.xlu0 %656
        %658 = vrot.lane.b32.xlu0 %v508, 16
        %v659 = vpop.permute.xlu0 %658
        %660 = vrot.lane.b32.xlu0 %v509, 16
        %v661 = vpop.permute.xlu0 %660
        %662 = vrot.lane.b32.xlu0 %v510, 16
        %v663 = vpop.permute.xlu0 %662
        %664 = vrot.lane.b32.xlu0 %v511, 16
        %v665 = vpop.permute.xlu0 %664
        %682 = vrot.lane.b32.xlu0 %v512, 20
        %v683 = vpop.permute.xlu0 %682
        %684 = vrot.lane.b32.xlu0 %v513, 20
        %v685 = vpop.permute.xlu0 %684
        %686 = vrot.lane.b32.xlu0 %v514, 20
        %v687 = vpop.permute.xlu0 %686
        %688 = vrot.lane.b32.xlu0 %v515, 20
        %v689 = vpop.permute.xlu0 %688
        %690 = vrot.lane.b32.xlu0 %v516, 20
        %v691 = vpop.permute.xlu0 %690
        %692 = vrot.lane.b32.xlu0 %v517, 20
        %v693 = vpop.permute.xlu0 %692
        %694 = vrot.lane.b32.xlu0 %v518, 20
        %v695 = vpop.permute.xlu0 %694
        %696 = vrot.lane.b32.xlu0 %v519, 20
        %v697 = vpop.permute.xlu0 %696
        %714 = vrot.lane.b32.xlu0 %v521, 24
        %v715 = vpop.permute.xlu0 %714
        %716 = vrot.lane.b32.xlu0 %v522, 24
        %v717 = vpop.permute.xlu0 %716
        %718 = vrot.lane.b32.xlu0 %v523, 24
        %v719 = vpop.permute.xlu0 %718
        %720 = vrot.lane.b32.xlu0 %v524, 24
        %v721 = vpop.permute.xlu0 %720
        %722 = vrot.lane.b32.xlu0 %v525, 24
        %v723 = vpop.permute.xlu0 %722
        %724 = vrot.lane.b32.xlu0 %v526, 24
        %v725 = vpop.permute.xlu0 %724
        %726 = vrot.lane.b32.xlu0 %v527, 24
        %v727 = vpop.permute.xlu0 %726
        %728 = vrot.lane.b32.xlu0 %v528, 24
        %v729 = vpop.permute.xlu0 %728
        %746 = vrot.lane.b32.xlu0 %v530, 28
        %v747 = vpop.permute.xlu0 %746
        %748 = vrot.lane.b32.xlu0 %v531, 28
        %v749 = vpop.permute.xlu0 %748
        %750 = vrot.lane.b32.xlu0 %v532, 28
        %v751 = vpop.permute.xlu0 %750
        %752 = vrot.lane.b32.xlu0 %v533, 28
        %v753 = vpop.permute.xlu0 %752
        %754 = vrot.lane.b32.xlu0 %v534, 28
        %v755 = vpop.permute.xlu0 %754
        %756 = vrot.lane.b32.xlu0 %v535, 28
        %v757 = vpop.permute.xlu0 %756
        %758 = vrot.lane.b32.xlu0 %v536, 28
        %v759 = vpop.permute.xlu0 %758
        %760 = vrot.lane.b32.xlu0 %v537, 28
        %v761 = vpop.permute.xlu0 %760
        %778 = vrot.lane.b32.xlu0 %v538, 32
        %v779 = vpop.permute.xlu0 %778
        %780 = vrot.lane.b32.xlu0 %v539, 32
        %v781 = vpop.permute.xlu0 %780
        %782 = vrot.lane.b32.xlu0 %v540, 32
        %v783 = vpop.permute.xlu0 %782
        %784 = vrot.lane.b32.xlu0 %v541, 32
        %v785 = vpop.permute.xlu0 %784
        %786 = vrot.lane.b32.xlu0 %v542, 32
        %v787 = vpop.permute.xlu0 %786
        %788 = vrot.lane.b32.xlu0 %v543, 32
        %v789 = vpop.permute.xlu0 %788
        %790 = vrot.lane.b32.xlu0 %v544, 32
        %v791 = vpop.permute.xlu0 %790
        %792 = vrot.lane.b32.xlu0 %v545, 32
        %v793 = vpop.permute.xlu0 %792
        %vm802 = vcmask 31744
        %v803 = vsel %vm802, %v472, %v555
        %v804 = vsel %vm802, %v473, %v557
        %v805 = vsel %vm802, %v474, %v559
        %v806 = vsel %vm802, %v475, %v561
        %v807 = vsel %vm802, %v476, %v563
        %v808 = vsel %vm802, %v477, %v565
        %v809 = vsel %vm802, %v478, %v567
        %v810 = vsel %vm802, %v479, %v569
        %vm811 = vcmask 64512
        %v812 = vsel %vm811, %v803, %v587
        %v813 = vsel %vm811, %v804, %v589
        %v814 = vsel %vm811, %v805, %v591
        %v815 = vsel %vm811, %v806, %v593
        %v816 = vsel %vm811, %v807, %v595
        %v817 = vsel %vm811, %v808, %v597
        %v818 = vsel %vm811, %v809, %v599
        %v819 = vsel %vm811, %v810, %v601
        %vm820 = vcmask 97280
        %v821 = vsel %vm820, %v812, %v619
        %v822 = vsel %vm820, %v813, %v621
        %v823 = vsel %vm820, %v814, %v623
        %v824 = vsel %vm820, %v815, %v625
        %v825 = vsel %vm820, %v816, %v627
        %v826 = vsel %vm820, %v817, %v629
        %v827 = vsel %vm820, %v818, %v631
        %v828 = vsel %vm820, %v819, %v633
        %vm829 = vcmask 130048
        %v830 = vsel %vm829, %v821, %v651
        %v831 = vsel %vm829, %v822, %v653
        %v832 = vsel %vm829, %v823, %v655
        %v833 = vsel %vm829, %v824, %v657
        %v834 = vsel %vm829, %v825, %v659
        %v835 = vsel %vm829, %v826, %v661
        %v836 = vsel %vm829, %v827, %v663
        %v837 = vsel %vm829, %v828, %v665
        %vm838 = vcmask 162816
        %v839 = vsel %vm838, %v830, %v683
        %v840 = vsel %vm838, %v831, %v685
        %v841 = vsel %vm838, %v832, %v687
        %v842 = vsel %vm838, %v833, %v689
        %v843 = vsel %vm838, %v834, %v691
        %v844 = vsel %vm838, %v835, %v693
        %v845 = vsel %vm838, %v836, %v695
        %v846 = vsel %vm838, %v837, %v697
        %vm847 = vcmask 195584
        %v848 = vsel %vm847, %v839, %v715
        %v849 = vsel %vm847, %v840, %v717
        %v850 = vsel %vm847, %v841, %v719
        %v851 = vsel %vm847, %v842, %v721
        %v852 = vsel %vm847, %v843, %v723
        %v853 = vsel %vm847, %v844, %v725
        %v854 = vsel %vm847, %v845, %v727
        %v855 = vsel %vm847, %v846, %v729
        %vm856 = vcmask 228352
        %v857 = vsel %vm856, %v848, %v747
        %v858 = vsel %vm856, %v849, %v749
        %v859 = vsel %vm856, %v850, %v751
        %v860 = vsel %vm856, %v851, %v753
        %v861 = vsel %vm856, %v852, %v755
        %v862 = vsel %vm856, %v853, %v757
        %v863 = vsel %vm856, %v854, %v759
        %v864 = vsel %vm856, %v855, %v761
        %vm865 = vcmask 261120
        %v866 = vsel %vm865, %v857, %v779
        %v867 = vsel %vm865, %v858, %v781
        %v868 = vsel %vm865, %v859, %v783
        %v869 = vsel %vm865, %v860, %v785
        %v870 = vsel %vm865, %v861, %v787
        %v871 = vsel %vm865, %v862, %v789
        %v872 = vsel %vm865, %v863, %v791
        %v873 = vsel %vm865, %v864, %v793
        %v874 = vld [vmem:[%s461 + $0x1] sm:$0xff]
        %v875 = vld [vmem:[%s461 + $0x11] sm:$0xff]
        %v876 = vld [vmem:[%s461 + $0x21] sm:$0xff]
        %v877 = vld [vmem:[%s461 + $0x31] sm:$0xff]
        %v878 = vld [vmem:[%s461 + $0x41] sm:$0xff]
        %v879 = vld [vmem:[%s461 + $0x51] sm:$0xff]
        %v880 = vld [vmem:[%s461 + $0x61] sm:$0xff]
        %v881 = vld [vmem:[%s461 + $0x71] sm:$0xff]
        %v882 = vld [vmem:[%s471 + $0x1] sm:$0xff]
        %v883 = vld [vmem:[%s471 + $0x11] sm:$0xff]
        %v884 = vld [vmem:[%s471 + $0x21] sm:$0xff]
        %v885 = vld [vmem:[%s471 + $0x31] sm:$0xff]
        %v886 = vld [vmem:[%s471 + $0x41] sm:$0xff]
        %v887 = vld [vmem:[%s471 + $0x51] sm:$0xff]
        %v888 = vld [vmem:[%s471 + $0x61] sm:$0xff]
        %v889 = vld [vmem:[%s471 + $0x71] sm:$0xff]
        %v890 = vld [vmem:[%s529 + $0x1] sm:$0xff]
        %v891 = vld [vmem:[%s529 + $0x11] sm:$0xff]
        %v892 = vld [vmem:[%s529 + $0x21] sm:$0xff]
        %v893 = vld [vmem:[%s529 + $0x31] sm:$0xff]
        %v894 = vld [vmem:[%s529 + $0x41] sm:$0xff]
        %v895 = vld [vmem:[%s529 + $0x51] sm:$0xff]
        %v896 = vld [vmem:[%s529 + $0x61] sm:$0xff]
        %v897 = vld [vmem:[%s529 + $0x71] sm:$0xff]
        %898 = vrot.lane.b32.xlu0 %v488, 4
        %v899 = vpop.permute.xlu0 %898
        %900 = vrot.lane.b32.xlu0 %v489, 4
        %v901 = vpop.permute.xlu0 %900
        %902 = vrot.lane.b32.xlu0 %v490, 4
        %v903 = vpop.permute.xlu0 %902
        %904 = vrot.lane.b32.xlu0 %v491, 4
        %v905 = vpop.permute.xlu0 %904
        %906 = vrot.lane.b32.xlu0 %v492, 4
        %v907 = vpop.permute.xlu0 %906
        %908 = vrot.lane.b32.xlu0 %v493, 4
        %v909 = vpop.permute.xlu0 %908
        %910 = vrot.lane.b32.xlu0 %v494, 4
        %v911 = vpop.permute.xlu0 %910
        %912 = vrot.lane.b32.xlu0 %v495, 4
        %v913 = vpop.permute.xlu0 %912
        %930 = vrot.lane.b32.xlu0 %v874, 8
        %v931 = vpop.permute.xlu0 %930
        %932 = vrot.lane.b32.xlu0 %v875, 8
        %v933 = vpop.permute.xlu0 %932
        %934 = vrot.lane.b32.xlu0 %v876, 8
        %v935 = vpop.permute.xlu0 %934
        %936 = vrot.lane.b32.xlu0 %v877, 8
        %v937 = vpop.permute.xlu0 %936
        %938 = vrot.lane.b32.xlu0 %v878, 8
        %v939 = vpop.permute.xlu0 %938
        %940 = vrot.lane.b32.xlu0 %v879, 8
        %v941 = vpop.permute.xlu0 %940
        %942 = vrot.lane.b32.xlu0 %v880, 8
        %v943 = vpop.permute.xlu0 %942
        %944 = vrot.lane.b32.xlu0 %v881, 8
        %v945 = vpop.permute.xlu0 %944
        %954 = vrot.lane.b32.xlu0 %v504, 12
        %v955 = vpop.permute.xlu0 %954
        %956 = vrot.lane.b32.xlu0 %v505, 12
        %v957 = vpop.permute.xlu0 %956
        %958 = vrot.lane.b32.xlu0 %v506, 12
        %v959 = vpop.permute.xlu0 %958
        %960 = vrot.lane.b32.xlu0 %v507, 12
        %v961 = vpop.permute.xlu0 %960
        %962 = vrot.lane.b32.xlu0 %v508, 12
        %v963 = vpop.permute.xlu0 %962
        %964 = vrot.lane.b32.xlu0 %v509, 12
        %v965 = vpop.permute.xlu0 %964
        %966 = vrot.lane.b32.xlu0 %v510, 12
        %v967 = vpop.permute.xlu0 %966
        %968 = vrot.lane.b32.xlu0 %v511, 12
        %v969 = vpop.permute.xlu0 %968
        %978 = vrot.lane.b32.xlu0 %v512, 16
        %v979 = vpop.permute.xlu0 %978
        %980 = vrot.lane.b32.xlu0 %v513, 16
        %v981 = vpop.permute.xlu0 %980
        %982 = vrot.lane.b32.xlu0 %v514, 16
        %v983 = vpop.permute.xlu0 %982
        %984 = vrot.lane.b32.xlu0 %v515, 16
        %v985 = vpop.permute.xlu0 %984
        %986 = vrot.lane.b32.xlu0 %v516, 16
        %v987 = vpop.permute.xlu0 %986
        %988 = vrot.lane.b32.xlu0 %v517, 16
        %v989 = vpop.permute.xlu0 %988
        %990 = vrot.lane.b32.xlu0 %v518, 16
        %v991 = vpop.permute.xlu0 %990
        %992 = vrot.lane.b32.xlu0 %v519, 16
        %v993 = vpop.permute.xlu0 %992
        %1010 = vrot.lane.b32.xlu0 %v882, 20
        %v1011 = vpop.permute.xlu0 %1010
        %1012 = vrot.lane.b32.xlu0 %v883, 20
        %v1013 = vpop.permute.xlu0 %1012
        %1014 = vrot.lane.b32.xlu0 %v884, 20
        %v1015 = vpop.permute.xlu0 %1014
        %1016 = vrot.lane.b32.xlu0 %v885, 20
        %v1017 = vpop.permute.xlu0 %1016
        %1018 = vrot.lane.b32.xlu0 %v886, 20
        %v1019 = vpop.permute.xlu0 %1018
        %1020 = vrot.lane.b32.xlu0 %v887, 20
        %v1021 = vpop.permute.xlu0 %1020
        %1022 = vrot.lane.b32.xlu0 %v888, 20
        %v1023 = vpop.permute.xlu0 %1022
        %1024 = vrot.lane.b32.xlu0 %v889, 20
        %v1025 = vpop.permute.xlu0 %1024
        %1034 = vrot.lane.b32.xlu0 %v530, 24
        %v1035 = vpop.permute.xlu0 %1034
        %1036 = vrot.lane.b32.xlu0 %v531, 24
        %v1037 = vpop.permute.xlu0 %1036
        %1038 = vrot.lane.b32.xlu0 %v532, 24
        %v1039 = vpop.permute.xlu0 %1038
        %1040 = vrot.lane.b32.xlu0 %v533, 24
        %v1041 = vpop.permute.xlu0 %1040
        %1042 = vrot.lane.b32.xlu0 %v534, 24
        %v1043 = vpop.permute.xlu0 %1042
        %1044 = vrot.lane.b32.xlu0 %v535, 24
        %v1045 = vpop.permute.xlu0 %1044
        %1046 = vrot.lane.b32.xlu0 %v536, 24
        %v1047 = vpop.permute.xlu0 %1046
        %1048 = vrot.lane.b32.xlu0 %v537, 24
        %v1049 = vpop.permute.xlu0 %1048
        %1058 = vrot.lane.b32.xlu0 %v538, 28
        %v1059 = vpop.permute.xlu0 %1058
        %1060 = vrot.lane.b32.xlu0 %v539, 28
        %v1061 = vpop.permute.xlu0 %1060
        %1062 = vrot.lane.b32.xlu0 %v540, 28
        %v1063 = vpop.permute.xlu0 %1062
        %1064 = vrot.lane.b32.xlu0 %v541, 28
        %v1065 = vpop.permute.xlu0 %1064
        %1066 = vrot.lane.b32.xlu0 %v542, 28
        %v1067 = vpop.permute.xlu0 %1066
        %1068 = vrot.lane.b32.xlu0 %v543, 28
        %v1069 = vpop.permute.xlu0 %1068
        %1070 = vrot.lane.b32.xlu0 %v544, 28
        %v1071 = vpop.permute.xlu0 %1070
        %1072 = vrot.lane.b32.xlu0 %v545, 28
        %v1073 = vpop.permute.xlu0 %1072
        %1090 = vrot.lane.b32.xlu0 %v890, 32
        %v1091 = vpop.permute.xlu0 %1090
        %1092 = vrot.lane.b32.xlu0 %v891, 32
        %v1093 = vpop.permute.xlu0 %1092
        %1094 = vrot.lane.b32.xlu0 %v892, 32
        %v1095 = vpop.permute.xlu0 %1094
        %1096 = vrot.lane.b32.xlu0 %v893, 32
        %v1097 = vpop.permute.xlu0 %1096
        %1098 = vrot.lane.b32.xlu0 %v894, 32
        %v1099 = vpop.permute.xlu0 %1098
        %1100 = vrot.lane.b32.xlu0 %v895, 32
        %v1101 = vpop.permute.xlu0 %1100
        %1102 = vrot.lane.b32.xlu0 %v896, 32
        %v1103 = vpop.permute.xlu0 %1102
        %1104 = vrot.lane.b32.xlu0 %v897, 32
        %v1105 = vpop.permute.xlu0 %1104
        %v1114 = vsel %vm802, %v480, %v899
        %v1115 = vsel %vm802, %v481, %v901
        %v1116 = vsel %vm802, %v482, %v903
        %v1117 = vsel %vm802, %v483, %v905
        %v1118 = vsel %vm802, %v484, %v907
        %v1119 = vsel %vm802, %v485, %v909
        %v1120 = vsel %vm802, %v486, %v911
        %v1121 = vsel %vm802, %v487, %v913
        %v1122 = vsel %vm811, %v1114, %v931
        %v1123 = vsel %vm811, %v1115, %v933
        %v1124 = vsel %vm811, %v1116, %v935
        %v1125 = vsel %vm811, %v1117, %v937
        %v1126 = vsel %vm811, %v1118, %v939
        %v1127 = vsel %vm811, %v1119, %v941
        %v1128 = vsel %vm811, %v1120, %v943
        %v1129 = vsel %vm811, %v1121, %v945
        %v1130 = vsel %vm820, %v1122, %v955
        %v1131 = vsel %vm820, %v1123, %v957
        %v1132 = vsel %vm820, %v1124, %v959
        %v1133 = vsel %vm820, %v1125, %v961
        %v1134 = vsel %vm820, %v1126, %v963
        %v1135 = vsel %vm820, %v1127, %v965
        %v1136 = vsel %vm820, %v1128, %v967
        %v1137 = vsel %vm820, %v1129, %v969
        %v1138 = vsel %vm829, %v1130, %v979
        %v1139 = vsel %vm829, %v1131, %v981
        %v1140 = vsel %vm829, %v1132, %v983
        %v1141 = vsel %vm829, %v1133, %v985
        %v1142 = vsel %vm829, %v1134, %v987
        %v1143 = vsel %vm829, %v1135, %v989
        %v1144 = vsel %vm829, %v1136, %v991
        %v1145 = vsel %vm829, %v1137, %v993
        %v1146 = vsel %vm838, %v1138, %v1011
        %v1147 = vsel %vm838, %v1139, %v1013
        %v1148 = vsel %vm838, %v1140, %v1015
        %v1149 = vsel %vm838, %v1141, %v1017
        %v1150 = vsel %vm838, %v1142, %v1019
        %v1151 = vsel %vm838, %v1143, %v1021
        %v1152 = vsel %vm838, %v1144, %v1023
        %v1153 = vsel %vm838, %v1145, %v1025
        %v1154 = vsel %vm847, %v1146, %v1035
        %v1155 = vsel %vm847, %v1147, %v1037
        %v1156 = vsel %vm847, %v1148, %v1039
        %v1157 = vsel %vm847, %v1149, %v1041
        %v1158 = vsel %vm847, %v1150, %v1043
        %v1159 = vsel %vm847, %v1151, %v1045
        %v1160 = vsel %vm847, %v1152, %v1047
        %v1161 = vsel %vm847, %v1153, %v1049
        %v1162 = vsel %vm856, %v1154, %v1059
        %v1163 = vsel %vm856, %v1155, %v1061
        %v1164 = vsel %vm856, %v1156, %v1063
        %v1165 = vsel %vm856, %v1157, %v1065
        %v1166 = vsel %vm856, %v1158, %v1067
        %v1167 = vsel %vm856, %v1159, %v1069
        %v1168 = vsel %vm856, %v1160, %v1071
        %v1169 = vsel %vm856, %v1161, %v1073
        %v1170 = vsel %vm865, %v1162, %v1091
        %v1171 = vsel %vm865, %v1163, %v1093
        %v1172 = vsel %vm865, %v1164, %v1095
        %v1173 = vsel %vm865, %v1165, %v1097
        %v1174 = vsel %vm865, %v1166, %v1099
        %v1175 = vsel %vm865, %v1167, %v1101
        %v1176 = vsel %vm865, %v1168, %v1103
        %v1177 = vsel %vm865, %v1169, %v1105
        %s1178 = scalar_lea.vmem %s466, 16
        %v1179 = vld [vmem:[%s1178] sm:$0xff]
        %v1180 = vld [vmem:[%s1178 + $0x10] sm:$0xff]
        %v1181 = vld [vmem:[%s1178 + $0x20] sm:$0xff]
        %v1182 = vld [vmem:[%s1178 + $0x30] sm:$0xff]
        %v1183 = vld [vmem:[%s1178 + $0x40] sm:$0xff]
        %v1184 = vld [vmem:[%s1178 + $0x50] sm:$0xff]
        %v1185 = vld [vmem:[%s1178 + $0x60] sm:$0xff]
        %v1186 = vld [vmem:[%s1178 + $0x70] sm:$0xff]
        %s1187 = scalar_lea.vmem %s471, 16
        %v1188 = vld [vmem:[%s1187] sm:$0xff]
        %v1189 = vld [vmem:[%s1187 + $0x10] sm:$0xff]
        %v1190 = vld [vmem:[%s1187 + $0x20] sm:$0xff]
        %v1191 = vld [vmem:[%s1187 + $0x30] sm:$0xff]
        %v1192 = vld [vmem:[%s1187 + $0x40] sm:$0xff]
        %v1193 = vld [vmem:[%s1187 + $0x50] sm:$0xff]
        %v1194 = vld [vmem:[%s1187 + $0x60] sm:$0xff]
        %v1195 = vld [vmem:[%s1187 + $0x70] sm:$0xff]
        %v1196 = vld [vmem:[%s1178 + $0x1] sm:$0xff]
        %v1197 = vld [vmem:[%s1178 + $0x11] sm:$0xff]
        %v1198 = vld [vmem:[%s1178 + $0x21] sm:$0xff]
        %v1199 = vld [vmem:[%s1178 + $0x31] sm:$0xff]
        %v1200 = vld [vmem:[%s1178 + $0x41] sm:$0xff]
        %v1201 = vld [vmem:[%s1178 + $0x51] sm:$0xff]
        %v1202 = vld [vmem:[%s1178 + $0x61] sm:$0xff]
        %v1203 = vld [vmem:[%s1178 + $0x71] sm:$0xff]
        %1204 = vrot.lane.b32.xlu0 %v504, 4
        %v1205 = vpop.permute.xlu0 %1204
        %1206 = vrot.lane.b32.xlu0 %v505, 4
        %v1207 = vpop.permute.xlu0 %1206
        %1208 = vrot.lane.b32.xlu0 %v506, 4
        %v1209 = vpop.permute.xlu0 %1208
        %1210 = vrot.lane.b32.xlu0 %v507, 4
        %v1211 = vpop.permute.xlu0 %1210
        %1212 = vrot.lane.b32.xlu0 %v508, 4
        %v1213 = vpop.permute.xlu0 %1212
        %1214 = vrot.lane.b32.xlu0 %v509, 4
        %v1215 = vpop.permute.xlu0 %1214
        %1216 = vrot.lane.b32.xlu0 %v510, 4
        %v1217 = vpop.permute.xlu0 %1216
        %1218 = vrot.lane.b32.xlu0 %v511, 4
        %v1219 = vpop.permute.xlu0 %1218
        %1228 = vrot.lane.b32.xlu0 %v512, 8
        %v1229 = vpop.permute.xlu0 %1228
        %1230 = vrot.lane.b32.xlu0 %v513, 8
        %v1231 = vpop.permute.xlu0 %1230
        %1232 = vrot.lane.b32.xlu0 %v514, 8
        %v1233 = vpop.permute.xlu0 %1232
        %1234 = vrot.lane.b32.xlu0 %v515, 8
        %v1235 = vpop.permute.xlu0 %1234
        %1236 = vrot.lane.b32.xlu0 %v516, 8
        %v1237 = vpop.permute.xlu0 %1236
        %1238 = vrot.lane.b32.xlu0 %v517, 8
        %v1239 = vpop.permute.xlu0 %1238
        %1240 = vrot.lane.b32.xlu0 %v518, 8
        %v1241 = vpop.permute.xlu0 %1240
        %1242 = vrot.lane.b32.xlu0 %v519, 8
        %v1243 = vpop.permute.xlu0 %1242
        %1252 = vrot.lane.b32.xlu0 %v521, 12
        %v1253 = vpop.permute.xlu0 %1252
        %1254 = vrot.lane.b32.xlu0 %v522, 12
        %v1255 = vpop.permute.xlu0 %1254
        %1256 = vrot.lane.b32.xlu0 %v523, 12
        %v1257 = vpop.permute.xlu0 %1256
        %1258 = vrot.lane.b32.xlu0 %v524, 12
        %v1259 = vpop.permute.xlu0 %1258
        %1260 = vrot.lane.b32.xlu0 %v525, 12
        %v1261 = vpop.permute.xlu0 %1260
        %1262 = vrot.lane.b32.xlu0 %v526, 12
        %v1263 = vpop.permute.xlu0 %1262
        %1264 = vrot.lane.b32.xlu0 %v527, 12
        %v1265 = vpop.permute.xlu0 %1264
        %1266 = vrot.lane.b32.xlu0 %v528, 12
        %v1267 = vpop.permute.xlu0 %1266
        %1276 = vrot.lane.b32.xlu0 %v530, 16
        %v1277 = vpop.permute.xlu0 %1276
        %1278 = vrot.lane.b32.xlu0 %v531, 16
        %v1279 = vpop.permute.xlu0 %1278
        %1280 = vrot.lane.b32.xlu0 %v532, 16
        %v1281 = vpop.permute.xlu0 %1280
        %1282 = vrot.lane.b32.xlu0 %v533, 16
        %v1283 = vpop.permute.xlu0 %1282
        %1284 = vrot.lane.b32.xlu0 %v534, 16
        %v1285 = vpop.permute.xlu0 %1284
        %1286 = vrot.lane.b32.xlu0 %v535, 16
        %v1287 = vpop.permute.xlu0 %1286
        %1288 = vrot.lane.b32.xlu0 %v536, 16
        %v1289 = vpop.permute.xlu0 %1288
        %1290 = vrot.lane.b32.xlu0 %v537, 16
        %v1291 = vpop.permute.xlu0 %1290
        %1300 = vrot.lane.b32.xlu0 %v538, 20
        %v1301 = vpop.permute.xlu0 %1300
        %1302 = vrot.lane.b32.xlu0 %v539, 20
        %v1303 = vpop.permute.xlu0 %1302
        %1304 = vrot.lane.b32.xlu0 %v540, 20
        %v1305 = vpop.permute.xlu0 %1304
        %1306 = vrot.lane.b32.xlu0 %v541, 20
        %v1307 = vpop.permute.xlu0 %1306
        %1308 = vrot.lane.b32.xlu0 %v542, 20
        %v1309 = vpop.permute.xlu0 %1308
        %1310 = vrot.lane.b32.xlu0 %v543, 20
        %v1311 = vpop.permute.xlu0 %1310
        %1312 = vrot.lane.b32.xlu0 %v544, 20
        %v1313 = vpop.permute.xlu0 %1312
        %1314 = vrot.lane.b32.xlu0 %v545, 20
        %v1315 = vpop.permute.xlu0 %1314
        %1332 = vrot.lane.b32.xlu0 %v1179, 24
        %v1333 = vpop.permute.xlu0 %1332
        %1334 = vrot.lane.b32.xlu0 %v1180, 24
        %v1335 = vpop.permute.xlu0 %1334
        %1336 = vrot.lane.b32.xlu0 %v1181, 24
        %v1337 = vpop.permute.xlu0 %1336
        %1338 = vrot.lane.b32.xlu0 %v1182, 24
        %v1339 = vpop.permute.xlu0 %1338
        %1340 = vrot.lane.b32.xlu0 %v1183, 24
        %v1341 = vpop.permute.xlu0 %1340
        %1342 = vrot.lane.b32.xlu0 %v1184, 24
        %v1343 = vpop.permute.xlu0 %1342
        %1344 = vrot.lane.b32.xlu0 %v1185, 24
        %v1345 = vpop.permute.xlu0 %1344
        %1346 = vrot.lane.b32.xlu0 %v1186, 24
        %v1347 = vpop.permute.xlu0 %1346
        %1364 = vrot.lane.b32.xlu0 %v1188, 28
        %v1365 = vpop.permute.xlu0 %1364
        %1366 = vrot.lane.b32.xlu0 %v1189, 28
        %v1367 = vpop.permute.xlu0 %1366
        %1368 = vrot.lane.b32.xlu0 %v1190, 28
        %v1369 = vpop.permute.xlu0 %1368
        %1370 = vrot.lane.b32.xlu0 %v1191, 28
        %v1371 = vpop.permute.xlu0 %1370
        %1372 = vrot.lane.b32.xlu0 %v1192, 28
        %v1373 = vpop.permute.xlu0 %1372
        %1374 = vrot.lane.b32.xlu0 %v1193, 28
        %v1375 = vpop.permute.xlu0 %1374
        %1376 = vrot.lane.b32.xlu0 %v1194, 28
        %v1377 = vpop.permute.xlu0 %1376
        %1378 = vrot.lane.b32.xlu0 %v1195, 28
        %v1379 = vpop.permute.xlu0 %1378
        %1396 = vrot.lane.b32.xlu0 %v1196, 32
        %v1397 = vpop.permute.xlu0 %1396
        %1398 = vrot.lane.b32.xlu0 %v1197, 32
        %v1399 = vpop.permute.xlu0 %1398
        %1400 = vrot.lane.b32.xlu0 %v1198, 32
        %v1401 = vpop.permute.xlu0 %1400
        %1402 = vrot.lane.b32.xlu0 %v1199, 32
        %v1403 = vpop.permute.xlu0 %1402
        %1404 = vrot.lane.b32.xlu0 %v1200, 32
        %v1405 = vpop.permute.xlu0 %1404
        %1406 = vrot.lane.b32.xlu0 %v1201, 32
        %v1407 = vpop.permute.xlu0 %1406
        %1408 = vrot.lane.b32.xlu0 %v1202, 32
        %v1409 = vpop.permute.xlu0 %1408
        %1410 = vrot.lane.b32.xlu0 %v1203, 32
        %v1411 = vpop.permute.xlu0 %1410
        %v1420 = vsel %vm802, %v496, %v1205
        %v1421 = vsel %vm802, %v497, %v1207
        %v1422 = vsel %vm802, %v498, %v1209
        %v1423 = vsel %vm802, %v499, %v1211
        %v1424 = vsel %vm802, %v500, %v1213
        %v1425 = vsel %vm802, %v501, %v1215
        %v1426 = vsel %vm802, %v502, %v1217
        %v1427 = vsel %vm802, %v503, %v1219
        %v1428 = vsel %vm811, %v1420, %v1229
        %v1429 = vsel %vm811, %v1421, %v1231
        %v1430 = vsel %vm811, %v1422, %v1233
        %v1431 = vsel %vm811, %v1423, %v1235
        %v1432 = vsel %vm811, %v1424, %v1237
        %v1433 = vsel %vm811, %v1425, %v1239
        %v1434 = vsel %vm811, %v1426, %v1241
        %v1435 = vsel %vm811, %v1427, %v1243
        %v1436 = vsel %vm820, %v1428, %v1253
        %v1437 = vsel %vm820, %v1429, %v1255
        %v1438 = vsel %vm820, %v1430, %v1257
        %v1439 = vsel %vm820, %v1431, %v1259
        %v1440 = vsel %vm820, %v1432, %v1261
        %v1441 = vsel %vm820, %v1433, %v1263
        %v1442 = vsel %vm820, %v1434, %v1265
        %v1443 = vsel %vm820, %v1435, %v1267
        %v1444 = vsel %vm829, %v1436, %v1277
        %v1445 = vsel %vm829, %v1437, %v1279
        %v1446 = vsel %vm829, %v1438, %v1281
        %v1447 = vsel %vm829, %v1439, %v1283
        %v1448 = vsel %vm829, %v1440, %v1285
        %v1449 = vsel %vm829, %v1441, %v1287
        %v1450 = vsel %vm829, %v1442, %v1289
        %v1451 = vsel %vm829, %v1443, %v1291
        %v1452 = vsel %vm838, %v1444, %v1301
        %v1453 = vsel %vm838, %v1445, %v1303
        %v1454 = vsel %vm838, %v1446, %v1305
        %v1455 = vsel %vm838, %v1447, %v1307
        %v1456 = vsel %vm838, %v1448, %v1309
        %v1457 = vsel %vm838, %v1449, %v1311
        %v1458 = vsel %vm838, %v1450, %v1313
        %v1459 = vsel %vm838, %v1451, %v1315
        %v1460 = vsel %vm847, %v1452, %v1333
        %v1461 = vsel %vm847, %v1453, %v1335
        %v1462 = vsel %vm847, %v1454, %v1337
        %v1463 = vsel %vm847, %v1455, %v1339
        %v1464 = vsel %vm847, %v1456, %v1341
        %v1465 = vsel %vm847, %v1457, %v1343
        %v1466 = vsel %vm847, %v1458, %v1345
        %v1467 = vsel %vm847, %v1459, %v1347
        %v1468 = vsel %vm856, %v1460, %v1365
        %v1469 = vsel %vm856, %v1461, %v1367
        %v1470 = vsel %vm856, %v1462, %v1369
        %v1471 = vsel %vm856, %v1463, %v1371
        %v1472 = vsel %vm856, %v1464, %v1373
        %v1473 = vsel %vm856, %v1465, %v1375
        %v1474 = vsel %vm856, %v1466, %v1377
        %v1475 = vsel %vm856, %v1467, %v1379
        %v1476 = vsel %vm865, %v1468, %v1397
        %v1477 = vsel %vm865, %v1469, %v1399
        %v1478 = vsel %vm865, %v1470, %v1401
        %v1479 = vsel %vm865, %v1471, %v1403
        %v1480 = vsel %vm865, %v1472, %v1405
        %v1481 = vsel %vm865, %v1473, %v1407
        %v1482 = vsel %vm865, %v1474, %v1409
        %v1483 = vsel %vm865, %v1475, %v1411
        %v1484 = vld [vmem:[%s1187 + $0x1] sm:$0xff]
        %v1485 = vld [vmem:[%s1187 + $0x11] sm:$0xff]
        %v1486 = vld [vmem:[%s1187 + $0x21] sm:$0xff]
        %v1487 = vld [vmem:[%s1187 + $0x31] sm:$0xff]
        %v1488 = vld [vmem:[%s1187 + $0x41] sm:$0xff]
        %v1489 = vld [vmem:[%s1187 + $0x51] sm:$0xff]
        %v1490 = vld [vmem:[%s1187 + $0x61] sm:$0xff]
        %v1491 = vld [vmem:[%s1187 + $0x71] sm:$0xff]
        %1492 = vrot.lane.b32.xlu0 %v512, 4
        %v1493 = vpop.permute.xlu0 %1492
        %1494 = vrot.lane.b32.xlu0 %v513, 4
        %v1495 = vpop.permute.xlu0 %1494
        %1496 = vrot.lane.b32.xlu0 %v514, 4
        %v1497 = vpop.permute.xlu0 %1496
        %1498 = vrot.lane.b32.xlu0 %v515, 4
        %v1499 = vpop.permute.xlu0 %1498
        %1500 = vrot.lane.b32.xlu0 %v516, 4
        %v1501 = vpop.permute.xlu0 %1500
        %1502 = vrot.lane.b32.xlu0 %v517, 4
        %v1503 = vpop.permute.xlu0 %1502
        %1504 = vrot.lane.b32.xlu0 %v518, 4
        %v1505 = vpop.permute.xlu0 %1504
        %1506 = vrot.lane.b32.xlu0 %v519, 4
        %v1507 = vpop.permute.xlu0 %1506
        %1516 = vrot.lane.b32.xlu0 %v882, 8
        %v1517 = vpop.permute.xlu0 %1516
        %1518 = vrot.lane.b32.xlu0 %v883, 8
        %v1519 = vpop.permute.xlu0 %1518
        %1520 = vrot.lane.b32.xlu0 %v884, 8
        %v1521 = vpop.permute.xlu0 %1520
        %1522 = vrot.lane.b32.xlu0 %v885, 8
        %v1523 = vpop.permute.xlu0 %1522
        %1524 = vrot.lane.b32.xlu0 %v886, 8
        %v1525 = vpop.permute.xlu0 %1524
        %1526 = vrot.lane.b32.xlu0 %v887, 8
        %v1527 = vpop.permute.xlu0 %1526
        %1528 = vrot.lane.b32.xlu0 %v888, 8
        %v1529 = vpop.permute.xlu0 %1528
        %1530 = vrot.lane.b32.xlu0 %v889, 8
        %v1531 = vpop.permute.xlu0 %1530
        %1540 = vrot.lane.b32.xlu0 %v530, 12
        %v1541 = vpop.permute.xlu0 %1540
        %1542 = vrot.lane.b32.xlu0 %v531, 12
        %v1543 = vpop.permute.xlu0 %1542
        %1544 = vrot.lane.b32.xlu0 %v532, 12
        %v1545 = vpop.permute.xlu0 %1544
        %1546 = vrot.lane.b32.xlu0 %v533, 12
        %v1547 = vpop.permute.xlu0 %1546
        %1548 = vrot.lane.b32.xlu0 %v534, 12
        %v1549 = vpop.permute.xlu0 %1548
        %1550 = vrot.lane.b32.xlu0 %v535, 12
        %v1551 = vpop.permute.xlu0 %1550
        %1552 = vrot.lane.b32.xlu0 %v536, 12
        %v1553 = vpop.permute.xlu0 %1552
        %1554 = vrot.lane.b32.xlu0 %v537, 12
        %v1555 = vpop.permute.xlu0 %1554
        %1564 = vrot.lane.b32.xlu0 %v538, 16
        %v1565 = vpop.permute.xlu0 %1564
        %1566 = vrot.lane.b32.xlu0 %v539, 16
        %v1567 = vpop.permute.xlu0 %1566
        %1568 = vrot.lane.b32.xlu0 %v540, 16
        %v1569 = vpop.permute.xlu0 %1568
        %1570 = vrot.lane.b32.xlu0 %v541, 16
        %v1571 = vpop.permute.xlu0 %1570
        %1572 = vrot.lane.b32.xlu0 %v542, 16
        %v1573 = vpop.permute.xlu0 %1572
        %1574 = vrot.lane.b32.xlu0 %v543, 16
        %v1575 = vpop.permute.xlu0 %1574
        %1576 = vrot.lane.b32.xlu0 %v544, 16
        %v1577 = vpop.permute.xlu0 %1576
        %1578 = vrot.lane.b32.xlu0 %v545, 16
        %v1579 = vpop.permute.xlu0 %1578
        %1588 = vrot.lane.b32.xlu0 %v890, 20
        %v1589 = vpop.permute.xlu0 %1588
        %1590 = vrot.lane.b32.xlu0 %v891, 20
        %v1591 = vpop.permute.xlu0 %1590
        %1592 = vrot.lane.b32.xlu0 %v892, 20
        %v1593 = vpop.permute.xlu0 %1592
        %1594 = vrot.lane.b32.xlu0 %v893, 20
        %v1595 = vpop.permute.xlu0 %1594
        %1596 = vrot.lane.b32.xlu0 %v894, 20
        %v1597 = vpop.permute.xlu0 %1596
        %1598 = vrot.lane.b32.xlu0 %v895, 20
        %v1599 = vpop.permute.xlu0 %1598
        %1600 = vrot.lane.b32.xlu0 %v896, 20
        %v1601 = vpop.permute.xlu0 %1600
        %1602 = vrot.lane.b32.xlu0 %v897, 20
        %v1603 = vpop.permute.xlu0 %1602
        %1612 = vrot.lane.b32.xlu0 %v1188, 24
        %v1613 = vpop.permute.xlu0 %1612
        %1614 = vrot.lane.b32.xlu0 %v1189, 24
        %v1615 = vpop.permute.xlu0 %1614
        %1616 = vrot.lane.b32.xlu0 %v1190, 24
        %v1617 = vpop.permute.xlu0 %1616
        %1618 = vrot.lane.b32.xlu0 %v1191, 24
        %v1619 = vpop.permute.xlu0 %1618
        %1620 = vrot.lane.b32.xlu0 %v1192, 24
        %v1621 = vpop.permute.xlu0 %1620
        %1622 = vrot.lane.b32.xlu0 %v1193, 24
        %v1623 = vpop.permute.xlu0 %1622
        %1624 = vrot.lane.b32.xlu0 %v1194, 24
        %v1625 = vpop.permute.xlu0 %1624
        %1626 = vrot.lane.b32.xlu0 %v1195, 24
        %v1627 = vpop.permute.xlu0 %1626
        %1636 = vrot.lane.b32.xlu0 %v1196, 28
        %v1637 = vpop.permute.xlu0 %1636
        %1638 = vrot.lane.b32.xlu0 %v1197, 28
        %v1639 = vpop.permute.xlu0 %1638
        %1640 = vrot.lane.b32.xlu0 %v1198, 28
        %v1641 = vpop.permute.xlu0 %1640
        %1642 = vrot.lane.b32.xlu0 %v1199, 28
        %v1643 = vpop.permute.xlu0 %1642
        %1644 = vrot.lane.b32.xlu0 %v1200, 28
        %v1645 = vpop.permute.xlu0 %1644
        %1646 = vrot.lane.b32.xlu0 %v1201, 28
        %v1647 = vpop.permute.xlu0 %1646
        %1648 = vrot.lane.b32.xlu0 %v1202, 28
        %v1649 = vpop.permute.xlu0 %1648
        %1650 = vrot.lane.b32.xlu0 %v1203, 28
        %v1651 = vpop.permute.xlu0 %1650
        %1668 = vrot.lane.b32.xlu0 %v1484, 32
        %v1669 = vpop.permute.xlu0 %1668
        %1670 = vrot.lane.b32.xlu0 %v1485, 32
        %v1671 = vpop.permute.xlu0 %1670
        %1672 = vrot.lane.b32.xlu0 %v1486, 32
        %v1673 = vpop.permute.xlu0 %1672
        %1674 = vrot.lane.b32.xlu0 %v1487, 32
        %v1675 = vpop.permute.xlu0 %1674
        %1676 = vrot.lane.b32.xlu0 %v1488, 32
        %v1677 = vpop.permute.xlu0 %1676
        %1678 = vrot.lane.b32.xlu0 %v1489, 32
        %v1679 = vpop.permute.xlu0 %1678
        %1680 = vrot.lane.b32.xlu0 %v1490, 32
        %v1681 = vpop.permute.xlu0 %1680
        %1682 = vrot.lane.b32.xlu0 %v1491, 32
        %v1683 = vpop.permute.xlu0 %1682
        %v1692 = vsel %vm802, %v504, %v1493
        %v1693 = vsel %vm802, %v505, %v1495
        %v1694 = vsel %vm802, %v506, %v1497
        %v1695 = vsel %vm802, %v507, %v1499
        %v1696 = vsel %vm802, %v508, %v1501
        %v1697 = vsel %vm802, %v509, %v1503
        %v1698 = vsel %vm802, %v510, %v1505
        %v1699 = vsel %vm802, %v511, %v1507
        %v1700 = vsel %vm811, %v1692, %v1517
        %v1701 = vsel %vm811, %v1693, %v1519
        %v1702 = vsel %vm811, %v1694, %v1521
        %v1703 = vsel %vm811, %v1695, %v1523
        %v1704 = vsel %vm811, %v1696, %v1525
        %v1705 = vsel %vm811, %v1697, %v1527
        %v1706 = vsel %vm811, %v1698, %v1529
        %v1707 = vsel %vm811, %v1699, %v1531
        %v1708 = vsel %vm820, %v1700, %v1541
        %v1709 = vsel %vm820, %v1701, %v1543
        %v1710 = vsel %vm820, %v1702, %v1545
        %v1711 = vsel %vm820, %v1703, %v1547
        %v1712 = vsel %vm820, %v1704, %v1549
        %v1713 = vsel %vm820, %v1705, %v1551
        %v1714 = vsel %vm820, %v1706, %v1553
        %v1715 = vsel %vm820, %v1707, %v1555
        %v1716 = vsel %vm829, %v1708, %v1565
        %v1717 = vsel %vm829, %v1709, %v1567
        %v1718 = vsel %vm829, %v1710, %v1569
        %v1719 = vsel %vm829, %v1711, %v1571
        %v1720 = vsel %vm829, %v1712, %v1573
        %v1721 = vsel %vm829, %v1713, %v1575
        %v1722 = vsel %vm829, %v1714, %v1577
        %v1723 = vsel %vm829, %v1715, %v1579
        %v1724 = vsel %vm838, %v1716, %v1589
        %v1725 = vsel %vm838, %v1717, %v1591
        %v1726 = vsel %vm838, %v1718, %v1593
        %v1727 = vsel %vm838, %v1719, %v1595
        %v1728 = vsel %vm838, %v1720, %v1597
        %v1729 = vsel %vm838, %v1721, %v1599
        %v1730 = vsel %vm838, %v1722, %v1601
        %v1731 = vsel %vm838, %v1723, %v1603
        %v1732 = vsel %vm847, %v1724, %v1613
        %v1733 = vsel %vm847, %v1725, %v1615
        %v1734 = vsel %vm847, %v1726, %v1617
        %v1735 = vsel %vm847, %v1727, %v1619
        %v1736 = vsel %vm847, %v1728, %v1621
        %v1737 = vsel %vm847, %v1729, %v1623
        %v1738 = vsel %vm847, %v1730, %v1625
        %v1739 = vsel %vm847, %v1731, %v1627
        %v1740 = vsel %vm856, %v1732, %v1637
        %v1741 = vsel %vm856, %v1733, %v1639
        %v1742 = vsel %vm856, %v1734, %v1641
        %v1743 = vsel %vm856, %v1735, %v1643
        %v1744 = vsel %vm856, %v1736, %v1645
        %v1745 = vsel %vm856, %v1737, %v1647
        %v1746 = vsel %vm856, %v1738, %v1649
        %v1747 = vsel %vm856, %v1739, %v1651
        %v1748 = vsel %vm865, %v1740, %v1669
        %v1749 = vsel %vm865, %v1741, %v1671
        %v1750 = vsel %vm865, %v1742, %v1673
        %v1751 = vsel %vm865, %v1743, %v1675
        %v1752 = vsel %vm865, %v1744, %v1677
        %v1753 = vsel %vm865, %v1745, %v1679
        %v1754 = vsel %vm865, %v1746, %v1681
        %v1755 = vsel %vm865, %v1747, %v1683
        %v1756 = vld [vmem:[%s4] sm:$0xff]
        %v1757 = vld [vmem:[%s4 + $0x8] sm:$0xff]
        %v1758 = vld [vmem:[%s4 + $0x10] sm:$0xff]
        %v1759 = vld [vmem:[%s4 + $0x18] sm:$0xff]
        %v1760 = vld [vmem:[%s4 + $0x20] sm:$0xf]
        %v1761 = vld [vmem:[%s5] sm:$0x1]
        %v1763 = vlaneseq
        %v1764 = vshrl.u32 %v1763, 7
        %v1765 = vsub.s32 0, %v1764
        %v1766 = vrot.slane %v1761, %v1765
        %vm1768 = vcmask 293888
        %v1770 = vsel %vm1768, %v866, 0
        %v1773 = vsel %vm1768, %v867, 0
        %v1776 = vsel %vm1768, %v868, 0
        %v1779 = vsel %vm1768, %v869, 0
        %v1782 = vsel %vm1768, %v870, 0
        %v1785 = vsel %vm1768, %v871, 0
        %v1788 = vsel %vm1768, %v872, 0
        %v1791 = vsel %vm1768, %v873, 0
        %v1794 = vsel %vm1768, %v1170, 0
        %v1797 = vsel %vm1768, %v1171, 0
        %v1800 = vsel %vm1768, %v1172, 0
        %v1803 = vsel %vm1768, %v1173, 0
        %v1806 = vsel %vm1768, %v1174, 0
        %v1809 = vsel %vm1768, %v1175, 0
        %v1812 = vsel %vm1768, %v1176, 0
        %v1815 = vsel %vm1768, %v1177, 0
        %v1818 = vsel %vm1768, %v1476, 0
        %v1821 = vsel %vm1768, %v1477, 0
        %v1824 = vsel %vm1768, %v1478, 0
        %v1827 = vsel %vm1768, %v1479, 0
        %v1830 = vsel %vm1768, %v1480, 0
        %v1833 = vsel %vm1768, %v1481, 0
        %v1836 = vsel %vm1768, %v1482, 0
        %v1839 = vsel %vm1768, %v1483, 0
        %v1842 = vsel %vm1768, %v1748, 0
        %v1845 = vsel %vm1768, %v1749, 0
        %v1848 = vsel %vm1768, %v1750, 0
        %v1851 = vsel %vm1768, %v1751, 0
        %v1854 = vsel %vm1768, %v1752, 0
        %v1857 = vsel %vm1768, %v1753, 0
        %v1860 = vsel %vm1768, %v1754, 0
        %v1863 = vsel %vm1768, %v1755, 0
        %vm1865 = vcmask 1043456
        %v1867 = vsel %vm1865, %v1760, 0
        %1869 = vmatprep.subr.mxu0 0.0
        %1870 = vmatpush1.msra.mxu0 %v1756
        %1871 = vmatprep.subr.mxu0 0.0
        %1872 = vmatpush1.msra.mxu0 %v1757
        %1873 = vmatprep.subr.mxu0 0.0
        %1874 = vmatpush1.msra.mxu0 %v1758
        %1875 = vmatprep.subr.mxu0 0.0
        %1876 = vmatpush1.msra.mxu0 %v1759
        %1877 = vmatprep.subr.mxu0 0.0
        %1878 = vmatpush1.msra.mxu0 %v1867
        %1879 = vmatprep.subr.mxu0 0.0
        %1880 = vmatpush1.msra.mxu0 0.0
        %1881 = vmatprep.subr.mxu0 0.0
        %1882 = vmatpush1.msra.mxu0 0.0
        %1883 = vmatprep.subr.mxu0 0.0
        %1884 = vmatpush1.msra.mxu0 0.0
        %1885 = vmatprep.subr.mxu0 0.0
        %1886 = vmatpush1.msra.mxu0 0.0
        %1887 = vmatprep.subr.mxu0 0.0
        %1888 = vmatpush1.msra.mxu0 0.0
        %1889 = vmatprep.subr.mxu0 0.0
        %1890 = vmatpush1.msra.mxu0 0.0
        %1891 = vmatprep.subr.mxu0 0.0
        %1892 = vmatpush1.msra.mxu0 0.0
        %1893 = vmatprep.subr.mxu0 0.0
        %1894 = vmatpush1.msra.mxu0 0.0
        %1895 = vmatprep.subr.mxu0 0.0
        %1896 = vmatpush1.msra.mxu0 0.0
        %1897 = vmatprep.subr.mxu0 0.0
        %1898 = vmatpush1.msra.mxu0 0.0
        %1899 = vmatprep.subr.mxu0 0.0
        %1900 = vmatpush1.msra.mxu0 0.0
        %1901 = vmatprep.subr.mxu0 0.0
        %1902 = vmatpush1.msra.mxu0 0.0
        %1903 = vmatprep.subr.mxu0 0.0
        %1904 = vmatpush1.msra.mxu0 0.0
        %1905 = vmatprep.subr.mxu0 0.0
        %1906 = vmatpush1.msra.mxu0 0.0
        %1907 = vmatprep.subr.mxu0 0.0
        %1908 = vmatpush1.msra.mxu0 0.0
        %1909 = vmatprep.subr.mxu0 0.0
        %1910 = vmatpush1.msra.mxu0 0.0
        %1911 = vmatprep.subr.mxu0 0.0
        %1912 = vmatpush1.msra.mxu0 0.0
        %1913 = vmatprep.subr.mxu0 0.0
        %1914 = vmatpush1.msra.mxu0 0.0
        %1915 = vmatprep.subr.mxu0 0.0
        %1916 = vmatpush1.msra.mxu0 0.0
        %1917 = vmatprep.subr.mxu0 0.0
        %1918 = vmatpush1.msra.mxu0 0.0
        %1919 = vmatprep.subr.mxu0 0.0
        %1920 = vmatpush1.msra.mxu0 0.0
        %1921 = vmatprep.subr.mxu0 0.0
        %1922 = vmatpush1.msra.mxu0 0.0
        %1923 = vmatprep.subr.mxu0 0.0
        %1924 = vmatpush1.msra.mxu0 0.0
        %1925 = vmatprep.subr.mxu0 0.0
        %1926 = vmatpush1.msra.mxu0 0.0
        %1927 = vmatprep.subr.mxu0 0.0
        %1928 = vmatpush1.msra.mxu0 0.0
        %1929 = vmatprep.subr.mxu0 0.0
        %1930 = vmatpush1.msra.mxu0 0.0
        %1931 = vmatprep.subr.mxu0 0.0
        %1932 = vmatpush1.msra.mxu0 0.0
        %1933 = vmatprep.mubr.f32.mxu0 0.0
        %1934 = vmatmul.mubr.f32.gmra.mrb[0].mxu0 %v1770
        %v1935 = vpop.f32.mrb[0].mxu0
        %v1936 = vadd.f32 %v1766, %v1935
        %v1937 = vpop.f32.mrb[0].mxu0
        %1938 = vmatprep.mubr.f32.mxu0 0.0
        %1939 = vmatmul.mubr.f32.gmra.mrb[0].mxu0 %v1773
        %v1940 = vpop.f32.mrb[0].mxu0
        %v1941 = vadd.f32 %v1766, %v1940
        %v1942 = vpop.f32.mrb[0].mxu0
        %1943 = vmatprep.mubr.f32.mxu0 0.0
        %1944 = vmatmul.mubr.f32.gmra.mrb[0].mxu0 %v1776
        %v1945 = vpop.f32.mrb[0].mxu0
        %v1946 = vadd.f32 %v1766, %v1945
        %v1947 = vpop.f32.mrb[0].mxu0
        %1948 = vmatprep.mubr.f32.mxu0 0.0
        %1949 = vmatmul.mubr.f32.gmra.mrb[0].mxu0 %v1779
        %v1950 = vpop.f32.mrb[0].mxu0
        %v1951 = vadd.f32 %v1766, %v1950
        %v1952 = vpop.f32.mrb[0].mxu0
        %1953 = vmatprep.mubr.f32.mxu0 0.0
        %1954 = vmatmul.mubr.f32.gmra.mrb[0].mxu0 %v1782
        %v1955 = vpop.f32.mrb[0].mxu0
        %v1956 = vadd.f32 %v1766, %v1955
        %v1957 = vpop.f32.mrb[0].mxu0
        %1958 = vmatprep.mubr.f32.mxu0 0.0
        %1959 = vmatmul.mubr.f32.gmra.mrb[0].mxu0 %v1785
        %v1960 = vpop.f32.mrb[0].mxu0
        %v1961 = vadd.f32 %v1766, %v1960
        %v1962 = vpop.f32.mrb[0].mxu0
        %1963 = vmatprep.mubr.f32.mxu0 0.0
        %1964 = vmatmul.mubr.f32.gmra.mrb[0].mxu0 %v1788
        %v1965 = vpop.f32.mrb[0].mxu0
        %v1966 = vadd.f32 %v1766, %v1965
        %v1967 = vpop.f32.mrb[0].mxu0
        %1968 = vmatprep.mubr.f32.mxu0 0.0
        %1969 = vmatmul.mubr.f32.gmra.mrb[0].mxu0 %v1791
        %v1970 = vpop.f32.mrb[0].mxu0
        %v1971 = vadd.f32 %v1766, %v1970
        %v1972 = vpop.f32.mrb[0].mxu0
        %1973 = vmatprep.mubr.f32.mxu0 0.0
        %1974 = vmatmul.mubr.f32.gmra.mrb[0].mxu0 %v1794
        %v1975 = vpop.f32.mrb[0].mxu0
        %v1976 = vadd.f32 %v1766, %v1975
        %v1977 = vpop.f32.mrb[0].mxu0
        %1978 = vmatprep.mubr.f32.mxu0 0.0
        %1979 = vmatmul.mubr.f32.gmra.mrb[0].mxu0 %v1797
        %v1980 = vpop.f32.mrb[0].mxu0
        %v1981 = vadd.f32 %v1766, %v1980
        %v1982 = vpop.f32.mrb[0].mxu0
        %1983 = vmatprep.mubr.f32.mxu0 0.0
        %1984 = vmatmul.mubr.f32.gmra.mrb[0].mxu0 %v1800
        %v1985 = vpop.f32.mrb[0].mxu0
        %v1986 = vadd.f32 %v1766, %v1985
        %v1987 = vpop.f32.mrb[0].mxu0
        %1988 = vmatprep.mubr.f32.mxu0 0.0
        %1989 = vmatmul.mubr.f32.gmra.mrb[0].mxu0 %v1803
        %v1990 = vpop.f32.mrb[0].mxu0
        %v1991 = vadd.f32 %v1766, %v1990
        %v1992 = vpop.f32.mrb[0].mxu0
        %1993 = vmatprep.mubr.f32.mxu0 0.0
        %1994 = vmatmul.mubr.f32.gmra.mrb[0].mxu0 %v1806
        %v1995 = vpop.f32.mrb[0].mxu0
        %v1996 = vadd.f32 %v1766, %v1995
        %v1997 = vpop.f32.mrb[0].mxu0
        %1998 = vmatprep.mubr.f32.mxu0 0.0
        %1999 = vmatmul.mubr.f32.gmra.mrb[0].mxu0 %v1809
        %v2000 = vpop.f32.mrb[0].mxu0
        %v2001 = vadd.f32 %v1766, %v2000
        %v2002 = vpop.f32.mrb[0].mxu0
        %2003 = vmatprep.mubr.f32.mxu0 0.0
        %2004 = vmatmul.mubr.f32.gmra.mrb[0].mxu0 %v1812
        %v2005 = vpop.f32.mrb[0].mxu0
        %v2006 = vadd.f32 %v1766, %v2005
        %v2007 = vpop.f32.mrb[0].mxu0
        %2008 = vmatprep.mubr.f32.mxu0 0.0
        %2009 = vmatmul.mubr.f32.gmra.mrb[0].mxu0 %v1815
        %v2010 = vpop.f32.mrb[0].mxu0
        %v2011 = vadd.f32 %v1766, %v2010
        %v2012 = vpop.f32.mrb[0].mxu0
        %2013 = vmatprep.mubr.f32.mxu0 0.0
        %2014 = vmatmul.mubr.f32.gmra.mrb[0].mxu0 %v1818
        %v2015 = vpop.f32.mrb[0].mxu0
        %v2016 = vadd.f32 %v1766, %v2015
        %v2017 = vpop.f32.mrb[0].mxu0
        %2018 = vmatprep.mubr.f32.mxu0 0.0
        %2019 = vmatmul.mubr.f32.gmra.mrb[0].mxu0 %v1821
        %v2020 = vpop.f32.mrb[0].mxu0
        %v2021 = vadd.f32 %v1766, %v2020
        %v2022 = vpop.f32.mrb[0].mxu0
        %2023 = vmatprep.mubr.f32.mxu0 0.0
        %2024 = vmatmul.mubr.f32.gmra.mrb[0].mxu0 %v1824
        %v2025 = vpop.f32.mrb[0].mxu0
        %v2026 = vadd.f32 %v1766, %v2025
        %v2027 = vpop.f32.mrb[0].mxu0
        %2028 = vmatprep.mubr.f32.mxu0 0.0
        %2029 = vmatmul.mubr.f32.gmra.mrb[0].mxu0 %v1827
        %v2030 = vpop.f32.mrb[0].mxu0
        %v2031 = vadd.f32 %v1766, %v2030
        %v2032 = vpop.f32.mrb[0].mxu0
        %2033 = vmatprep.mubr.f32.mxu0 0.0
        %2034 = vmatmul.mubr.f32.gmra.mrb[0].mxu0 %v1830
        %v2035 = vpop.f32.mrb[0].mxu0
        %v2036 = vadd.f32 %v1766, %v2035
        %v2037 = vpop.f32.mrb[0].mxu0
        %2038 = vmatprep.mubr.f32.mxu0 0.0
        %2039 = vmatmul.mubr.f32.gmra.mrb[0].mxu0 %v1833
        %v2040 = vpop.f32.mrb[0].mxu0
        %v2041 = vadd.f32 %v1766, %v2040
        %v2042 = vpop.f32.mrb[0].mxu0
        %2043 = vmatprep.mubr.f32.mxu0 0.0
        %2044 = vmatmul.mubr.f32.gmra.mrb[0].mxu0 %v1836
        %v2045 = vpop.f32.mrb[0].mxu0
        %v2046 = vadd.f32 %v1766, %v2045
        %v2047 = vpop.f32.mrb[0].mxu0
        %2048 = vmatprep.mubr.f32.mxu0 0.0
        %2049 = vmatmul.mubr.f32.gmra.mrb[0].mxu0 %v1839
        %v2050 = vpop.f32.mrb[0].mxu0
        %v2051 = vadd.f32 %v1766, %v2050
        %v2052 = vpop.f32.mrb[0].mxu0
        %2053 = vmatprep.mubr.f32.mxu0 0.0
        %2054 = vmatmul.mubr.f32.gmra.mrb[0].mxu0 %v1842
        %v2055 = vpop.f32.mrb[0].mxu0
        %v2056 = vadd.f32 %v1766, %v2055
        %v2057 = vpop.f32.mrb[0].mxu0
        %2058 = vmatprep.mubr.f32.mxu0 0.0
        %2059 = vmatmul.mubr.f32.gmra.mrb[0].mxu0 %v1845
        %v2060 = vpop.f32.mrb[0].mxu0
        %v2061 = vadd.f32 %v1766, %v2060
        %v2062 = vpop.f32.mrb[0].mxu0
        %2063 = vmatprep.mubr.f32.mxu0 0.0
        %2064 = vmatmul.mubr.f32.gmra.mrb[0].mxu0 %v1848
        %v2065 = vpop.f32.mrb[0].mxu0
        %v2066 = vadd.f32 %v1766, %v2065
        %v2067 = vpop.f32.mrb[0].mxu0
        %2068 = vmatprep.mubr.f32.mxu0 0.0
        %2069 = vmatmul.mubr.f32.gmra.mrb[0].mxu0 %v1851
        %v2070 = vpop.f32.mrb[0].mxu0
        %v2071 = vadd.f32 %v1766, %v2070
        %v2072 = vpop.f32.mrb[0].mxu0
        %2073 = vmatprep.mubr.f32.mxu0 0.0
        %2074 = vmatmul.mubr.f32.gmra.mrb[0].mxu0 %v1854
        %v2075 = vpop.f32.mrb[0].mxu0
        %v2076 = vadd.f32 %v1766, %v2075
        %v2077 = vpop.f32.mrb[0].mxu0
        %2078 = vmatprep.mubr.f32.mxu0 0.0
        %2079 = vmatmul.mubr.f32.gmra.mrb[0].mxu0 %v1857
        %v2080 = vpop.f32.mrb[0].mxu0
        %v2081 = vadd.f32 %v1766, %v2080
        %v2082 = vpop.f32.mrb[0].mxu0
        %2083 = vmatprep.mubr.f32.mxu0 0.0
        %2084 = vmatmul.mubr.f32.gmra.mrb[0].mxu0 %v1860
        %v2085 = vpop.f32.mrb[0].mxu0
        %v2086 = vadd.f32 %v1766, %v2085
        %v2087 = vpop.f32.mrb[0].mxu0
        %2088 = vmatprep.mubr.f32.mxu0 0.0
        %2089 = vmatmul.mubr.f32.gmra.mrb[0].mxu0 %v1863
        %v2090 = vpop.f32.mrb[0].mxu0
        %v2091 = vadd.f32 %v1766, %v2090
        %v2092 = vpop.f32.mrb[0].mxu0
        %2093 = vdwg.mxu0
        %v2094 = vmax.f32 %v1936, 0.0
        %v2095 = vmax.f32 %v1941, 0.0
        %v2096 = vmax.f32 %v1946, 0.0
        %v2097 = vmax.f32 %v1951, 0.0
        %v2098 = vmax.f32 %v1956, 0.0
        %v2099 = vmax.f32 %v1961, 0.0
        %v2100 = vmax.f32 %v1966, 0.0
        %v2101 = vmax.f32 %v1971, 0.0
        %v2102 = vmax.f32 %v1976, 0.0
        %v2103 = vmax.f32 %v1981, 0.0
        %v2104 = vmax.f32 %v1986, 0.0
        %v2105 = vmax.f32 %v1991, 0.0
        %v2106 = vmax.f32 %v1996, 0.0
        %v2107 = vmax.f32 %v2001, 0.0
        %v2108 = vmax.f32 %v2006, 0.0
        %v2109 = vmax.f32 %v2011, 0.0
        %v2110 = vmax.f32 %v2016, 0.0
        %v2111 = vmax.f32 %v2021, 0.0
        %v2112 = vmax.f32 %v2026, 0.0
        %v2113 = vmax.f32 %v2031, 0.0
        %v2114 = vmax.f32 %v2036, 0.0
        %v2115 = vmax.f32 %v2041, 0.0
        %v2116 = vmax.f32 %v2046, 0.0
        %v2117 = vmax.f32 %v2051, 0.0
        %v2118 = vmax.f32 %v2056, 0.0
        %v2119 = vmax.f32 %v2061, 0.0
        %v2120 = vmax.f32 %v2066, 0.0
        %v2121 = vmax.f32 %v2071, 0.0
        %v2122 = vmax.f32 %v2076, 0.0
        %v2123 = vmax.f32 %v2081, 0.0
        %v2124 = vmax.f32 %v2086, 0.0
        %v2125 = vmax.f32 %v2091, 0.0
        %v2134 = vrot.slane 0.0, 7
        %v2135 = vrot.slane %v2118, 7
        %v2136 = vrot.slane %v2119, 7
        %v2137 = vrot.slane %v2120, 7
        %v2138 = vrot.slane %v2121, 7
        %v2139 = vrot.slane %v2122, 7
        %v2140 = vrot.slane %v2123, 7
        %v2141 = vrot.slane %v2124, 7
        %vm2150 = vcmask 1040384
        %v2151 = vsel %vm2150, 0.0, %v2134
        %v2152 = vsel %vm2150, 0.0, %v2135
        %v2153 = vsel %vm2150, 0.0, %v2136
        %v2154 = vsel %vm2150, 0.0, %v2137
        %v2155 = vsel %vm2150, 0.0, %v2138
        %v2156 = vsel %vm2150, 0.0, %v2139
        %v2157 = vsel %vm2150, 0.0, %v2140
        %v2158 = vsel %vm2150, 0.0, %v2141
        %v2167 = vrot.slane %v2102, 7
        %v2168 = vrot.slane %v2103, 7
        %v2169 = vrot.slane %v2104, 7
        %v2170 = vrot.slane %v2105, 7
        %v2171 = vrot.slane %v2106, 7
        %v2172 = vrot.slane %v2107, 7
        %v2173 = vrot.slane %v2108, 7
        %v2174 = vrot.slane %v2109, 7
        %v2183 = vsel %vm2150, 0.0, %v2167
        %v2184 = vsel %vm2150, 0.0, %v2168
        %v2185 = vsel %vm2150, 0.0, %v2169
        %v2186 = vsel %vm2150, 0.0, %v2170
        %v2187 = vsel %vm2150, 0.0, %v2171
        %v2188 = vsel %vm2150, 0.0, %v2172
        %v2189 = vsel %vm2150, 0.0, %v2173
        %v2190 = vsel %vm2150, 0.0, %v2174
        %v2192 = vrot.slane %v2125, 7
        %v2194 = vsel %vm2150, 0.0, %v2192
        %2202 = vrot.lane.b32.xlu0 0.0, 8
        %v2203 = vpop.permute.xlu0 %2202
        %2204 = vrot.lane.b32.xlu0 %v2110, 8
        %v2205 = vpop.permute.xlu0 %2204
        %2206 = vrot.lane.b32.xlu0 %v2111, 8
        %v2207 = vpop.permute.xlu0 %2206
        %2208 = vrot.lane.b32.xlu0 %v2112, 8
        %v2209 = vpop.permute.xlu0 %2208
        %2210 = vrot.lane.b32.xlu0 %v2113, 8
        %v2211 = vpop.permute.xlu0 %2210
        %2212 = vrot.lane.b32.xlu0 %v2114, 8
        %v2213 = vpop.permute.xlu0 %2212
        %2214 = vrot.lane.b32.xlu0 %v2115, 8
        %v2215 = vpop.permute.xlu0 %2214
        %2216 = vrot.lane.b32.xlu0 %v2116, 8
        %v2217 = vpop.permute.xlu0 %2216
        %2226 = vrot.lane.b32.xlu0 0.0, 16
        %v2227 = vpop.permute.xlu0 %2226
        %2228 = vrot.lane.b32.xlu0 %v2118, 16
        %v2229 = vpop.permute.xlu0 %2228
        %2230 = vrot.lane.b32.xlu0 %v2119, 16
        %v2231 = vpop.permute.xlu0 %2230
        %2232 = vrot.lane.b32.xlu0 %v2120, 16
        %v2233 = vpop.permute.xlu0 %2232
        %2234 = vrot.lane.b32.xlu0 %v2121, 16
        %v2235 = vpop.permute.xlu0 %2234
        %2236 = vrot.lane.b32.xlu0 %v2122, 16
        %v2237 = vpop.permute.xlu0 %2236
        %2238 = vrot.lane.b32.xlu0 %v2123, 16
        %v2239 = vpop.permute.xlu0 %2238
        %2240 = vrot.lane.b32.xlu0 %v2124, 16
        %v2241 = vpop.permute.xlu0 %2240
        %2258 = vrot.lane.b32.xlu0 %v2183, 24
        %v2259 = vpop.permute.xlu0 %2258
        %2260 = vrot.lane.b32.xlu0 %v2184, 24
        %v2261 = vpop.permute.xlu0 %2260
        %2262 = vrot.lane.b32.xlu0 %v2185, 24
        %v2263 = vpop.permute.xlu0 %2262
        %2264 = vrot.lane.b32.xlu0 %v2186, 24
        %v2265 = vpop.permute.xlu0 %2264
        %2266 = vrot.lane.b32.xlu0 %v2187, 24
        %v2267 = vpop.permute.xlu0 %2266
        %2268 = vrot.lane.b32.xlu0 %v2188, 24
        %v2269 = vpop.permute.xlu0 %2268
        %2270 = vrot.lane.b32.xlu0 %v2189, 24
        %v2271 = vpop.permute.xlu0 %2270
        %2272 = vrot.lane.b32.xlu0 %v2190, 24
        %v2273 = vpop.permute.xlu0 %2272
        %2290 = vrot.lane.b32.xlu0 %v2094, 32
        %v2291 = vpop.permute.xlu0 %2290
        %2292 = vrot.lane.b32.xlu0 %v2095, 32
        %v2293 = vpop.permute.xlu0 %2292
        %2294 = vrot.lane.b32.xlu0 %v2096, 32
        %v2295 = vpop.permute.xlu0 %2294
        %2296 = vrot.lane.b32.xlu0 %v2097, 32
        %v2297 = vpop.permute.xlu0 %2296
        %2298 = vrot.lane.b32.xlu0 %v2098, 32
        %v2299 = vpop.permute.xlu0 %2298
        %2300 = vrot.lane.b32.xlu0 %v2099, 32
        %v2301 = vpop.permute.xlu0 %2300
        %2302 = vrot.lane.b32.xlu0 %v2100, 32
        %v2303 = vpop.permute.xlu0 %2302
        %2304 = vrot.lane.b32.xlu0 %v2101, 32
        %v2305 = vpop.permute.xlu0 %2304
        %2314 = vrot.lane.b32.xlu0 %v2102, 40
        %v2315 = vpop.permute.xlu0 %2314
        %2316 = vrot.lane.b32.xlu0 %v2103, 40
        %v2317 = vpop.permute.xlu0 %2316
        %2318 = vrot.lane.b32.xlu0 %v2104, 40
        %v2319 = vpop.permute.xlu0 %2318
        %2320 = vrot.lane.b32.xlu0 %v2105, 40
        %v2321 = vpop.permute.xlu0 %2320
        %2322 = vrot.lane.b32.xlu0 %v2106, 40
        %v2323 = vpop.permute.xlu0 %2322
        %2324 = vrot.lane.b32.xlu0 %v2107, 40
        %v2325 = vpop.permute.xlu0 %2324
        %2326 = vrot.lane.b32.xlu0 %v2108, 40
        %v2327 = vpop.permute.xlu0 %2326
        %2328 = vrot.lane.b32.xlu0 %v2109, 40
        %v2329 = vpop.permute.xlu0 %2328
        %2346 = vrot.lane.b32.xlu0 %v2152, 48
        %v2347 = vpop.permute.xlu0 %2346
        %2348 = vrot.lane.b32.xlu0 %v2153, 48
        %v2349 = vpop.permute.xlu0 %2348
        %2350 = vrot.lane.b32.xlu0 %v2154, 48
        %v2351 = vpop.permute.xlu0 %2350
        %2352 = vrot.lane.b32.xlu0 %v2155, 48
        %v2353 = vpop.permute.xlu0 %2352
        %2354 = vrot.lane.b32.xlu0 %v2156, 48
        %v2355 = vpop.permute.xlu0 %2354
        %2356 = vrot.lane.b32.xlu0 %v2157, 48
        %v2357 = vpop.permute.xlu0 %2356
        %2358 = vrot.lane.b32.xlu0 %v2158, 48
        %v2359 = vpop.permute.xlu0 %2358
        %2360 = vrot.lane.b32.xlu0 %v2194, 48
        %v2361 = vpop.permute.xlu0 %2360
        %2371 = vrot.lane.b32.xlu0 %v2110, 56
        %v2372 = vpop.permute.xlu0 %2371
        %2373 = vrot.lane.b32.xlu0 %v2111, 56
        %v2374 = vpop.permute.xlu0 %2373
        %2375 = vrot.lane.b32.xlu0 %v2112, 56
        %v2376 = vpop.permute.xlu0 %2375
        %2377 = vrot.lane.b32.xlu0 %v2113, 56
        %v2378 = vpop.permute.xlu0 %2377
        %2379 = vrot.lane.b32.xlu0 %v2114, 56
        %v2380 = vpop.permute.xlu0 %2379
        %2381 = vrot.lane.b32.xlu0 %v2115, 56
        %v2382 = vpop.permute.xlu0 %2381
        %2383 = vrot.lane.b32.xlu0 %v2116, 56
        %v2384 = vpop.permute.xlu0 %2383
        %2385 = vrot.lane.b32.xlu0 %v2117, 56
        %v2386 = vpop.permute.xlu0 %2385
        %2395 = vrot.lane.b32.xlu0 %v2118, 64
        %v2396 = vpop.permute.xlu0 %2395
        %2397 = vrot.lane.b32.xlu0 %v2119, 64
        %v2398 = vpop.permute.xlu0 %2397
        %2399 = vrot.lane.b32.xlu0 %v2120, 64
        %v2400 = vpop.permute.xlu0 %2399
        %2401 = vrot.lane.b32.xlu0 %v2121, 64
        %v2402 = vpop.permute.xlu0 %2401
        %2403 = vrot.lane.b32.xlu0 %v2122, 64
        %v2404 = vpop.permute.xlu0 %2403
        %2405 = vrot.lane.b32.xlu0 %v2123, 64
        %v2406 = vpop.permute.xlu0 %2405
        %2407 = vrot.lane.b32.xlu0 %v2124, 64
        %v2408 = vpop.permute.xlu0 %2407
        %2409 = vrot.lane.b32.xlu0 %v2125, 64
        %v2410 = vpop.permute.xlu0 %2409
        %v2419 = vsel %vm811, %v2151, %v2203
        %v2420 = vsel %vm811, %v2152, %v2205
        %v2421 = vsel %vm811, %v2153, %v2207
        %v2422 = vsel %vm811, %v2154, %v2209
        %v2423 = vsel %vm811, %v2155, %v2211
        %v2424 = vsel %vm811, %v2156, %v2213
        %v2425 = vsel %vm811, %v2157, %v2215
        %v2426 = vsel %vm811, %v2158, %v2217
        %v2427 = vsel %vm829, %v2419, %v2227
        %v2428 = vsel %vm829, %v2420, %v2229
        %v2429 = vsel %vm829, %v2421, %v2231
        %v2430 = vsel %vm829, %v2422, %v2233
        %v2431 = vsel %vm829, %v2423, %v2235
        %v2432 = vsel %vm829, %v2424, %v2237
        %v2433 = vsel %vm829, %v2425, %v2239
        %v2434 = vsel %vm829, %v2426, %v2241
        %v2435 = vsel %vm847, %v2427, %v2259
        %v2436 = vsel %vm847, %v2428, %v2261
        %v2437 = vsel %vm847, %v2429, %v2263
        %v2438 = vsel %vm847, %v2430, %v2265
        %v2439 = vsel %vm847, %v2431, %v2267
        %v2440 = vsel %vm847, %v2432, %v2269
        %v2441 = vsel %vm847, %v2433, %v2271
        %v2442 = vsel %vm847, %v2434, %v2273
        %v2443 = vsel %vm865, %v2435, %v2291
        %v2444 = vsel %vm865, %v2436, %v2293
        %v2445 = vsel %vm865, %v2437, %v2295
        %v2446 = vsel %vm865, %v2438, %v2297
        %v2447 = vsel %vm865, %v2439, %v2299
        %v2448 = vsel %vm865, %v2440, %v2301
        %v2449 = vsel %vm865, %v2441, %v2303
        %v2450 = vsel %vm865, %v2442, %v2305
        %vm2451 = vcmask 326656
        %v2452 = vsel %vm2451, %v2443, %v2315
        %v2453 = vsel %vm2451, %v2444, %v2317
        %v2454 = vsel %vm2451, %v2445, %v2319
        %v2455 = vsel %vm2451, %v2446, %v2321
        %v2456 = vsel %vm2451, %v2447, %v2323
        %v2457 = vsel %vm2451, %v2448, %v2325
        %v2458 = vsel %vm2451, %v2449, %v2327
        %v2459 = vsel %vm2451, %v2450, %v2329
        %vm2460 = vcmask 392192
        %v2461 = vsel %vm2460, %v2452, %v2347
        %v2462 = vsel %vm2460, %v2453, %v2349
        %v2463 = vsel %vm2460, %v2454, %v2351
        %v2464 = vsel %vm2460, %v2455, %v2353
        %v2465 = vsel %vm2460, %v2456, %v2355
        %v2466 = vsel %vm2460, %v2457, %v2357
        %v2467 = vsel %vm2460, %v2458, %v2359
        %v2468 = vsel %vm2460, %v2459, %v2361
        %vm2469 = vcmask 457728
        %v2470 = vsel %vm2469, %v2461, %v2372
        %v2471 = vsel %vm2469, %v2462, %v2374
        %v2472 = vsel %vm2469, %v2463, %v2376
        %v2473 = vsel %vm2469, %v2464, %v2378
        %v2474 = vsel %vm2469, %v2465, %v2380
        %v2475 = vsel %vm2469, %v2466, %v2382
        %v2476 = vsel %vm2469, %v2467, %v2384
        %v2477 = vsel %vm2469, %v2468, %v2386
        %vm2478 = vcmask 523264
        %v2479 = vsel %vm2478, %v2470, %v2396
        %v2480 = vsel %vm2478, %v2471, %v2398
        %v2481 = vsel %vm2478, %v2472, %v2400
        %v2482 = vsel %vm2478, %v2473, %v2402
        %v2483 = vsel %vm2478, %v2474, %v2404
        %v2484 = vsel %vm2478, %v2475, %v2406
        %v2485 = vsel %vm2478, %v2476, %v2408
        %v2486 = vsel %vm2478, %v2477, %v2410
        %v2487 = vld [vmem:[%s6] sm:$0xff]
        %v2488 = vld [vmem:[%s6 + $0x8] sm:$0xff]
        %v2489 = vld [vmem:[%s6 + $0x10] sm:$0xff]
        %v2490 = vld [vmem:[%s6 + $0x18] sm:$0xff]
        %v2491 = vld [vmem:[%s6 + $0x20] sm:$0xff]
        %v2492 = vld [vmem:[%s6 + $0x28] sm:$0xff]
        %v2493 = vld [vmem:[%s6 + $0x30] sm:$0xff]
        %v2494 = vld [vmem:[%s6 + $0x38] sm:$0xff]
        %v2495 = vld [vmem:[%s6 + $0x40] sm:$0xff]
        %v2496 = vld [vmem:[%s7] sm:$0x1]
        %v2498 = vlaneseq
        %v2499 = vshrl.u32 %v2498, 7
        %v2500 = vsub.s32 0, %v2499
        %v2501 = vrot.slane %v2496, %v2500
        %vm2503 = vcmask 588800
        %v2505 = vsel %vm2503, %v2479, 0
        %v2508 = vsel %vm2503, %v2480, 0
        %v2511 = vsel %vm2503, %v2481, 0
        %v2514 = vsel %vm2503, %v2482, 0
        %v2517 = vsel %vm2503, %v2483, 0
        %v2520 = vsel %vm2503, %v2484, 0
        %v2523 = vsel %vm2503, %v2485, 0
        %v2526 = vsel %vm2503, %v2486, 0
        %2528 = vmatprep.subr.mxu0 0.0
        %2529 = vmatpush1.msra.mxu0 %v2487
        %2530 = vmatprep.subr.mxu0 0.0
        %2531 = vmatpush1.msra.mxu0 %v2488
        %2532 = vmatprep.subr.mxu0 0.0
        %2533 = vmatpush1.msra.mxu0 %v2489
        %2534 = vmatprep.subr.mxu0 0.0
        %2535 = vmatpush1.msra.mxu0 %v2490
        %2536 = vmatprep.subr.mxu0 0.0
        %2537 = vmatpush1.msra.mxu0 %v2491
        %2538 = vmatprep.subr.mxu0 0.0
        %2539 = vmatpush1.msra.mxu0 %v2492
        %2540 = vmatprep.subr.mxu0 0.0
        %2541 = vmatpush1.msra.mxu0 %v2493
        %2542 = vmatprep.subr.mxu0 0.0
        %2543 = vmatpush1.msra.mxu0 %v2494
        %2544 = vmatprep.subr.mxu0 0.0
        %2545 = vmatpush1.msra.mxu0 %v2495
        %2546 = vmatprep.subr.mxu0 0.0
        %2547 = vmatpush1.msra.mxu0 0.0
        %2548 = vmatprep.subr.mxu0 0.0
        %2549 = vmatpush1.msra.mxu0 0.0
        %2550 = vmatprep.subr.mxu0 0.0
        %2551 = vmatpush1.msra.mxu0 0.0
        %2552 = vmatprep.subr.mxu0 0.0
        %2553 = vmatpush1.msra.mxu0 0.0
        %2554 = vmatprep.subr.mxu0 0.0
        %2555 = vmatpush1.msra.mxu0 0.0
        %2556 = vmatprep.subr.mxu0 0.0
        %2557 = vmatpush1.msra.mxu0 0.0
        %2558 = vmatprep.subr.mxu0 0.0
        %2559 = vmatpush1.msra.mxu0 0.0
        %2560 = vmatprep.subr.mxu0 0.0
        %2561 = vmatpush1.msra.mxu0 0.0
        %2562 = vmatprep.subr.mxu0 0.0
        %2563 = vmatpush1.msra.mxu0 0.0
        %2564 = vmatprep.subr.mxu0 0.0
        %2565 = vmatpush1.msra.mxu0 0.0
        %2566 = vmatprep.subr.mxu0 0.0
        %2567 = vmatpush1.msra.mxu0 0.0
        %2568 = vmatprep.subr.mxu0 0.0
        %2569 = vmatpush1.msra.mxu0 0.0
        %2570 = vmatprep.subr.mxu0 0.0
        %2571 = vmatpush1.msra.mxu0 0.0
        %2572 = vmatprep.subr.mxu0 0.0
        %2573 = vmatpush1.msra.mxu0 0.0
        %2574 = vmatprep.subr.mxu0 0.0
        %2575 = vmatpush1.msra.mxu0 0.0
        %2576 = vmatprep.subr.mxu0 0.0
        %2577 = vmatpush1.msra.mxu0 0.0
        %2578 = vmatprep.subr.mxu0 0.0
        %2579 = vmatpush1.msra.mxu0 0.0
        %2580 = vmatprep.subr.mxu0 0.0
        %2581 = vmatpush1.msra.mxu0 0.0
        %2582 = vmatprep.subr.mxu0 0.0
        %2583 = vmatpush1.msra.mxu0 0.0
        %2584 = vmatprep.subr.mxu0 0.0
        %2585 = vmatpush1.msra.mxu0 0.0
        %2586 = vmatprep.subr.mxu0 0.0
        %2587 = vmatpush1.msra.mxu0 0.0
        %2588 = vmatprep.subr.mxu0 0.0
        %2589 = vmatpush1.msra.mxu0 0.0
        %2590 = vmatprep.subr.mxu0 0.0
        %2591 = vmatpush1.msra.mxu0 0.0
        %2592 = vmatprep.mubr.f32.mxu0 0.0
        %2593 = vmatmul.mubr.f32.gmra.mrb[0].mxu0 %v2505
        %v2594 = vpop.f32.mrb[0].mxu0
        %v2595 = vadd.f32 %v2501, %v2594
        %v2596 = vpop.f32.mrb[0].mxu0
        %2597 = vmatprep.mubr.f32.mxu0 0.0
        %2598 = vmatmul.mubr.f32.gmra.mrb[0].mxu0 %v2508
        %v2599 = vpop.f32.mrb[0].mxu0
        %v2600 = vadd.f32 %v2501, %v2599
        %v2601 = vpop.f32.mrb[0].mxu0
        %2602 = vmatprep.mubr.f32.mxu0 0.0
        %2603 = vmatmul.mubr.f32.gmra.mrb[0].mxu0 %v2511
        %v2604 = vpop.f32.mrb[0].mxu0
        %v2605 = vadd.f32 %v2501, %v2604
        %v2606 = vpop.f32.mrb[0].mxu0
        %2607 = vmatprep.mubr.f32.mxu0 0.0
        %2608 = vmatmul.mubr.f32.gmra.mrb[0].mxu0 %v2514
        %v2609 = vpop.f32.mrb[0].mxu0
        %v2610 = vadd.f32 %v2501, %v2609
        %v2611 = vpop.f32.mrb[0].mxu0
        %2612 = vmatprep.mubr.f32.mxu0 0.0
        %2613 = vmatmul.mubr.f32.gmra.mrb[0].mxu0 %v2517
        %v2614 = vpop.f32.mrb[0].mxu0
        %v2615 = vadd.f32 %v2501, %v2614
        %v2616 = vpop.f32.mrb[0].mxu0
        %2617 = vmatprep.mubr.f32.mxu0 0.0
        %2618 = vmatmul.mubr.f32.gmra.mrb[0].mxu0 %v2520
        %v2619 = vpop.f32.mrb[0].mxu0
        %v2620 = vadd.f32 %v2501, %v2619
        %v2621 = vpop.f32.mrb[0].mxu0
        %2622 = vmatprep.mubr.f32.mxu0 0.0
        %2623 = vmatmul.mubr.f32.gmra.mrb[0].mxu0 %v2523
        %v2624 = vpop.f32.mrb[0].mxu0
        %v2625 = vadd.f32 %v2501, %v2624
        %v2626 = vpop.f32.mrb[0].mxu0
        %2627 = vmatprep.mubr.f32.mxu0 0.0
        %2628 = vmatmul.mubr.f32.gmra.mrb[0].mxu0 %v2526
        %v2629 = vpop.f32.mrb[0].mxu0
        %v2630 = vadd.f32 %v2501, %v2629
        %v2631 = vpop.f32.mrb[0].mxu0
        %2632 = vdwg.mxu0
        %v2633 = vmax.f32 %v2595, 0.0
        %v2634 = vmax.f32 %v2600, 0.0
        %v2635 = vmax.f32 %v2605, 0.0
        %v2636 = vmax.f32 %v2610, 0.0
        %v2637 = vmax.f32 %v2615, 0.0
        %v2638 = vmax.f32 %v2620, 0.0
        %v2639 = vmax.f32 %v2625, 0.0
        %v2640 = vmax.f32 %v2630, 0.0
        %v2641 = vld [vmem:[%s8] sm:$0xff]
        %v2642 = vld [vmem:[%s8 + $0x8] sm:$0xff]
        %v2643 = vld [vmem:[%s9] sm:$0x1]
        %v2645 = vlaneseq
        %v2646 = vshrl.u32 %v2645, 7
        %v2647 = vsub.s32 0, %v2646
        %v2648 = vrot.slane %v2643, %v2647
        %v2651 = vsel %vm829, %v2633, 0
        %v2654 = vsel %vm829, %v2634, 0
        %v2657 = vsel %vm829, %v2635, 0
        %v2660 = vsel %vm829, %v2636, 0
        %v2663 = vsel %vm829, %v2637, 0
        %v2666 = vsel %vm829, %v2638, 0
        %v2669 = vsel %vm829, %v2639, 0
        %v2672 = vsel %vm829, %v2640, 0
        %2674 = vmatprep.subr.mxu0 0.0
        %2675 = vmatpush1.msra.mxu0 %v2641
        %2676 = vmatprep.subr.mxu0 0.0
        %2677 = vmatpush1.msra.mxu0 %v2642
        %2678 = vmatprep.subr.mxu0 0.0
        %2679 = vmatpush1.msra.mxu0 0.0
        %2680 = vmatprep.subr.mxu0 0.0
        %2681 = vmatpush1.msra.mxu0 0.0
        %2682 = vmatprep.subr.mxu0 0.0
        %2683 = vmatpush1.msra.mxu0 0.0
        %2684 = vmatprep.subr.mxu0 0.0
        %2685 = vmatpush1.msra.mxu0 0.0
        %2686 = vmatprep.subr.mxu0 0.0
        %2687 = vmatpush1.msra.mxu0 0.0
        %2688 = vmatprep.subr.mxu0 0.0
        %2689 = vmatpush1.msra.mxu0 0.0
        %2690 = vmatprep.subr.mxu0 0.0
        %2691 = vmatpush1.msra.mxu0 0.0
        %2692 = vmatprep.subr.mxu0 0.0
        %2693 = vmatpush1.msra.mxu0 0.0
        %2694 = vmatprep.subr.mxu0 0.0
        %2695 = vmatpush1.msra.mxu0 0.0
        %2696 = vmatprep.subr.mxu0 0.0
        %2697 = vmatpush1.msra.mxu0 0.0
        %2698 = vmatprep.subr.mxu0 0.0
        %2699 = vmatpush1.msra.mxu0 0.0
        %2700 = vmatprep.subr.mxu0 0.0
        %2701 = vmatpush1.msra.mxu0 0.0
        %2702 = vmatprep.subr.mxu0 0.0
        %2703 = vmatpush1.msra.mxu0 0.0
        %2704 = vmatprep.subr.mxu0 0.0
        %2705 = vmatpush1.msra.mxu0 0.0
        %2706 = vmatprep.subr.mxu0 0.0
        %2707 = vmatpush1.msra.mxu0 0.0
        %2708 = vmatprep.subr.mxu0 0.0
        %2709 = vmatpush1.msra.mxu0 0.0
        %2710 = vmatprep.subr.mxu0 0.0
        %2711 = vmatpush1.msra.mxu0 0.0
        %2712 = vmatprep.subr.mxu0 0.0
        %2713 = vmatpush1.msra.mxu0 0.0
        %2714 = vmatprep.subr.mxu0 0.0
        %2715 = vmatpush1.msra.mxu0 0.0
        %2716 = vmatprep.subr.mxu0 0.0
        %2717 = vmatpush1.msra.mxu0 0.0
        %2718 = vmatprep.subr.mxu0 0.0
        %2719 = vmatpush1.msra.mxu0 0.0
        %2720 = vmatprep.subr.mxu0 0.0
        %2721 = vmatpush1.msra.mxu0 0.0
        %2722 = vmatprep.subr.mxu0 0.0
        %2723 = vmatpush1.msra.mxu0 0.0
        %2724 = vmatprep.subr.mxu0 0.0
        %2725 = vmatpush1.msra.mxu0 0.0
        %2726 = vmatprep.subr.mxu0 0.0
        %2727 = vmatpush1.msra.mxu0 0.0
        %2728 = vmatprep.subr.mxu0 0.0
        %2729 = vmatpush1.msra.mxu0 0.0
        %2730 = vmatprep.subr.mxu0 0.0
        %2731 = vmatpush1.msra.mxu0 0.0
        %2732 = vmatprep.subr.mxu0 0.0
        %2733 = vmatpush1.msra.mxu0 0.0
        %2734 = vmatprep.subr.mxu0 0.0
        %2735 = vmatpush1.msra.mxu0 0.0
        %2736 = vmatprep.subr.mxu0 0.0
        %2737 = vmatpush1.msra.mxu0 0.0
        %2738 = vmatprep.mubr.f32.mxu0 0.0
        %2739 = vmatmul.mubr.f32.gmra.mrb[0].mxu0 %v2651
        %v2740 = vpop.f32.mrb[0].mxu0
        %v2741 = vadd.f32 %v2648, %v2740
        %v2742 = vpop.f32.mrb[0].mxu0
        %2743 = vmatprep.mubr.f32.mxu0 0.0
        %2744 = vmatmul.mubr.f32.gmra.mrb[0].mxu0 %v2654
        %v2745 = vpop.f32.mrb[0].mxu0
        %v2746 = vadd.f32 %v2648, %v2745
        %v2747 = vpop.f32.mrb[0].mxu0
        %2748 = vmatprep.mubr.f32.mxu0 0.0
        %2749 = vmatmul.mubr.f32.gmra.mrb[0].mxu0 %v2657
        %v2750 = vpop.f32.mrb[0].mxu0
        %v2751 = vadd.f32 %v2648, %v2750
        %v2752 = vpop.f32.mrb[0].mxu0
        %2753 = vmatprep.mubr.f32.mxu0 0.0
        %2754 = vmatmul.mubr.f32.gmra.mrb[0].mxu0 %v2660
        %v2755 = vpop.f32.mrb[0].mxu0
        %v2756 = vadd.f32 %v2648, %v2755
        %v2757 = vpop.f32.mrb[0].mxu0
        %2758 = vmatprep.mubr.f32.mxu0 0.0
        %2759 = vmatmul.mubr.f32.gmra.mrb[0].mxu0 %v2663
        %v2760 = vpop.f32.mrb[0].mxu0
        %v2761 = vadd.f32 %v2648, %v2760
        %v2762 = vpop.f32.mrb[0].mxu0
        %2763 = vmatprep.mubr.f32.mxu0 0.0
        %2764 = vmatmul.mubr.f32.gmra.mrb[0].mxu0 %v2666
        %v2765 = vpop.f32.mrb[0].mxu0
        %v2766 = vadd.f32 %v2648, %v2765
        %v2767 = vpop.f32.mrb[0].mxu0
        %2768 = vmatprep.mubr.f32.mxu0 0.0
        %2769 = vmatmul.mubr.f32.gmra.mrb[0].mxu0 %v2669
        %v2770 = vpop.f32.mrb[0].mxu0
        %v2771 = vadd.f32 %v2648, %v2770
        %v2772 = vpop.f32.mrb[0].mxu0
        %2773 = vmatprep.mubr.f32.mxu0 0.0
        %2774 = vmatmul.mubr.f32.gmra.mrb[0].mxu0 %v2672
        %v2775 = vpop.f32.mrb[0].mxu0
        %v2776 = vadd.f32 %v2648, %v2775
        %v2777 = vpop.f32.mrb[0].mxu0
        %2778 = vdwg.mxu0
        %v2779 = vmax.f32 %v2741, 0.0
        %v2780 = vmax.f32 %v2746, 0.0
        %v2781 = vmax.f32 %v2751, 0.0
        %v2782 = vmax.f32 %v2756, 0.0
        %v2783 = vmax.f32 %v2761, 0.0
        %v2784 = vmax.f32 %v2766, 0.0
        %v2785 = vmax.f32 %v2771, 0.0
        %v2786 = vmax.f32 %v2776, 0.0
        %v2787 = vld [vmem:[%s10] sm:$0xff]
        %v2788 = vld [vmem:[%s10 + $0x8] sm:$0xff]
        %v2789 = vld [vmem:[%s11] sm:$0x1]
        %v2791 = vlaneseq
        %v2792 = vshrl.u32 %v2791, 7
        %v2793 = vsub.s32 0, %v2792
        %v2794 = vrot.slane %v2789, %v2793
        %v2797 = vsel %vm829, %v2779, 0
        %v2800 = vsel %vm829, %v2780, 0
        %v2803 = vsel %vm829, %v2781, 0
        %v2806 = vsel %vm829, %v2782, 0
        %v2809 = vsel %vm829, %v2783, 0
        %v2812 = vsel %vm829, %v2784, 0
        %v2815 = vsel %vm829, %v2785, 0
        %v2818 = vsel %vm829, %v2786, 0
        %2820 = vmatprep.subr.mxu0 0.0
        %2821 = vmatpush1.msra.mxu0 %v2787
        %2822 = vmatprep.subr.mxu0 0.0
        %2823 = vmatpush1.msra.mxu0 %v2788
        %2824 = vmatprep.subr.mxu0 0.0
        %2825 = vmatpush1.msra.mxu0 0.0
        %2826 = vmatprep.subr.mxu0 0.0
        %2827 = vmatpush1.msra.mxu0 0.0
        %2828 = vmatprep.subr.mxu0 0.0
        %2829 = vmatpush1.msra.mxu0 0.0
        %2830 = vmatprep.subr.mxu0 0.0
        %2831 = vmatpush1.msra.mxu0 0.0
        %2832 = vmatprep.subr.mxu0 0.0
        %2833 = vmatpush1.msra.mxu0 0.0
        %2834 = vmatprep.subr.mxu0 0.0
        %2835 = vmatpush1.msra.mxu0 0.0
        %2836 = vmatprep.subr.mxu0 0.0
        %2837 = vmatpush1.msra.mxu0 0.0
        %2838 = vmatprep.subr.mxu0 0.0
        %2839 = vmatpush1.msra.mxu0 0.0
        %2840 = vmatprep.subr.mxu0 0.0
        %2841 = vmatpush1.msra.mxu0 0.0
        %2842 = vmatprep.subr.mxu0 0.0
        %2843 = vmatpush1.msra.mxu0 0.0
        %2844 = vmatprep.subr.mxu0 0.0
        %2845 = vmatpush1.msra.mxu0 0.0
        %2846 = vmatprep.subr.mxu0 0.0
        %2847 = vmatpush1.msra.mxu0 0.0
        %2848 = vmatprep.subr.mxu0 0.0
        %2849 = vmatpush1.msra.mxu0 0.0
        %2850 = vmatprep.subr.mxu0 0.0
        %2851 = vmatpush1.msra.mxu0 0.0
        %2852 = vmatprep.subr.mxu0 0.0
        %2853 = vmatpush1.msra.mxu0 0.0
        %2854 = vmatprep.subr.mxu0 0.0
        %2855 = vmatpush1.msra.mxu0 0.0
        %2856 = vmatprep.subr.mxu0 0.0
        %2857 = vmatpush1.msra.mxu0 0.0
        %2858 = vmatprep.subr.mxu0 0.0
        %2859 = vmatpush1.msra.mxu0 0.0
        %2860 = vmatprep.subr.mxu0 0.0
        %2861 = vmatpush1.msra.mxu0 0.0
        %2862 = vmatprep.subr.mxu0 0.0
        %2863 = vmatpush1.msra.mxu0 0.0
        %2864 = vmatprep.subr.mxu0 0.0
        %2865 = vmatpush1.msra.mxu0 0.0
        %2866 = vmatprep.subr.mxu0 0.0
        %2867 = vmatpush1.msra.mxu0 0.0
        %2868 = vmatprep.subr.mxu0 0.0
        %2869 = vmatpush1.msra.mxu0 0.0
        %2870 = vmatprep.subr.mxu0 0.0
        %2871 = vmatpush1.msra.mxu0 0.0
        %2872 = vmatprep.subr.mxu0 0.0
        %2873 = vmatpush1.msra.mxu0 0.0
        %2874 = vmatprep.subr.mxu0 0.0
        %2875 = vmatpush1.msra.mxu0 0.0
        %2876 = vmatprep.subr.mxu0 0.0
        %2877 = vmatpush1.msra.mxu0 0.0
        %2878 = vmatprep.subr.mxu0 0.0
        %2879 = vmatpush1.msra.mxu0 0.0
        %2880 = vmatprep.subr.mxu0 0.0
        %2881 = vmatpush1.msra.mxu0 0.0
        %2882 = vmatprep.subr.mxu0 0.0
        %2883 = vmatpush1.msra.mxu0 0.0
        %2884 = vmatprep.mubr.f32.mxu0 0.0
        %2885 = vmatmul.mubr.f32.gmra.mrb[0].mxu0 %v2797
        %v2886 = vpop.f32.mrb[0].mxu0
        %v2887 = vadd.f32 %v2794, %v2886
        %v2888 = vpop.f32.mrb[0].mxu0
        %2889 = vmatprep.mubr.f32.mxu0 0.0
        %2890 = vmatmul.mubr.f32.gmra.mrb[0].mxu0 %v2800
        %v2891 = vpop.f32.mrb[0].mxu0
        %v2892 = vadd.f32 %v2794, %v2891
        %v2893 = vpop.f32.mrb[0].mxu0
        %2894 = vmatprep.mubr.f32.mxu0 0.0
        %2895 = vmatmul.mubr.f32.gmra.mrb[0].mxu0 %v2803
        %v2896 = vpop.f32.mrb[0].mxu0
        %v2897 = vadd.f32 %v2794, %v2896
        %v2898 = vpop.f32.mrb[0].mxu0
        %2899 = vmatprep.mubr.f32.mxu0 0.0
        %2900 = vmatmul.mubr.f32.gmra.mrb[0].mxu0 %v2806
        %v2901 = vpop.f32.mrb[0].mxu0
        %v2902 = vadd.f32 %v2794, %v2901
        %v2903 = vpop.f32.mrb[0].mxu0
        %2904 = vmatprep.mubr.f32.mxu0 0.0
        %2905 = vmatmul.mubr.f32.gmra.mrb[0].mxu0 %v2809
        %v2906 = vpop.f32.mrb[0].mxu0
        %v2907 = vadd.f32 %v2794, %v2906
        %v2908 = vpop.f32.mrb[0].mxu0
        %2909 = vmatprep.mubr.f32.mxu0 0.0
        %2910 = vmatmul.mubr.f32.gmra.mrb[0].mxu0 %v2812
        %v2911 = vpop.f32.mrb[0].mxu0
        %v2912 = vadd.f32 %v2794, %v2911
        %v2913 = vpop.f32.mrb[0].mxu0
        %2914 = vmatprep.mubr.f32.mxu0 0.0
        %2915 = vmatmul.mubr.f32.gmra.mrb[0].mxu0 %v2815
        %v2916 = vpop.f32.mrb[0].mxu0
        %v2917 = vadd.f32 %v2794, %v2916
        %v2918 = vpop.f32.mrb[0].mxu0
        %2919 = vmatprep.mubr.f32.mxu0 0.0
        %2920 = vmatmul.mubr.f32.gmra.mrb[0].mxu0 %v2818
        %v2921 = vpop.f32.mrb[0].mxu0
        %v2922 = vadd.f32 %v2794, %v2921
        %v2923 = vpop.f32.mrb[0].mxu0
        %2924 = vdwg.mxu0
        %vm2925 = vcmask 171008
        %2926 = vst.msk [vmem:[%s451] sm:$0xff] %vm2925, %v2887
        %2927 = vst.msk [vmem:[%s451 + $0x8] sm:$0xff] %vm2925, %v2892
        %2928 = vst.msk [vmem:[%s451 + $0x10] sm:$0xff] %vm2925, %v2897
        %2929 = vst.msk [vmem:[%s451 + $0x18] sm:$0xff] %vm2925, %v2902
        %2930 = vst.msk [vmem:[%s451 + $0x20] sm:$0xff] %vm2925, %v2907
        %2931 = vst.msk [vmem:[%s451 + $0x28] sm:$0xff] %vm2925, %v2912
        %2932 = vst.msk [vmem:[%s451 + $0x30] sm:$0xff] %vm2925, %v2917
        %2933 = vst.msk [vmem:[%s451 + $0x38] sm:$0xff] %vm2925, %v2922
        %s2934 = sand.u32 %s306, 1
        %s2935 = scalar_lea.sflag [#allocation3], %s2934
        %s2936 = sand.u32 %s306, 1
        %s2937 = smul.addr %s2936, 64
        %s2938 = scalar_lea.vmem [#allocation2], %s2937
        // Predicated region
        $region69: #{_detector_forward.1} parent=67 // pred_check
          %p2939 = pneg %p316
        $region70: #{_detector_forward.1} parent=67 // pred_check_branch
          %2941 = sbr.rel (%p2939) target = $region72
        $region71: #{_detector_forward.1} parent=67 // pred_region
          %s2943 = ssub.s32 1024, 1024
          %2944 = vsyncadd %s2935, %s2943
          %s2945 = smul.addr %s26, 8
          %s2946 = smul.addr %s2945, 128
          %s2947 = scalar_lea.hbm %s12, %s2946
          %s2948 = sshll.u32 %s2938, 4
          %s2949 = int_to_ptr.vmem [resolvable:$true] %s2948
          %2954 = dma.vmem_to_hbm [thread:$0]  %s2949, 1024, %s2947, %s2935, 128, 128, 8
        $region72: #{_detector_forward.1} parent=67 // pred_fallthru
          _
      $region68: #{_detector_forward.1} parent=5 // pred_fallthru
        _
      %p2955 = scmp.le.s32.totalorder 2, %s21
      // Predicated region
      $region73: #{_detector_forward.1} parent=5 // pred_check
        %p2956 = pneg %p2955
      $region74: #{_detector_forward.1} parent=5 // pred_check_branch
        %2958 = sbr.rel (%p2956) target = $region76
      $region75: #{_detector_forward.1} parent=5 // pred_region
        %s2959 = ssub.s32 %s21, 2
        // Predicated region
        $region77: #{_detector_forward.1} parent=75 // pred_check
          %p2960 = pneg %p322
        $region78: #{_detector_forward.1} parent=75 // pred_check_branch
          %2962 = sbr.rel (%p2960) target = $region80
        $region79: #{_detector_forward.1} parent=75 // pred_region
          %s2963 = sand.u32 %s307, 1
          %s2964 = scalar_lea.sflag [#allocation3], %s2963
          %s2965 = sand.u32 %s307, 1
          %s2966 = smul.addr %s2965, 64
          %s2967 = scalar_lea.vmem [#allocation2], %s2966
          %2968 = dma.done %s2964, 1024
        $region80: #{_detector_forward.1} parent=75 // pred_fallthru
          _
      $region76: #{_detector_forward.1} parent=5 // pred_fallthru
        _
    $region6: #{_detector_forward.1} parent=1 // loop_footer
      %s25 = sadd.s32 1, %s21
    $region7: #{_detector_forward.1} parent=1 // loop_footer_branch
      %20 = sbr.rel target = $region3
    $region8: #{_detector_forward.1} parent=1 // loop_exit
      _
    %2969 = vsyncpa [#allocation3], 1
    %s2970 = scalar_lea.sflag [#allocation3], 1
    %2971 = vsyncpa %s2970, 1

</llo_original>
